<compile_context>
chip_gen: v7x
topology: tpu7x:2x2x1
jax: 0.10.0
libtpu: 0.0.40
codegen_flags: <defaults>
</compile_context>

<pallas_src>
import jax
import jax.numpy as jnp
from jax.experimental import pallas as pl
from jax.experimental.pallas import tpu as pltpu

_EPS = 1e-5


def _round_up(x, m):
    return ((x + m - 1) // m) * m


def _cdiv(a, b):
    return (a + b - 1) // b


def _make_fused_kernel(num_layers, K, tile_t, seq_len, halo, dims_p, acts):
    pad = (K - 1) // 2
    # zero margin used for the per-layer shifted taps; 16-row aligned so all
    # concatenations stay aligned to the packed bf16 (16, 128) tile.
    margin = _round_up(pad, 16) if pad > 0 else 0
    S = tile_t + 2 * halo  # slab rows processed per grid step

    def kernel(xl_ref, xc_ref, xr_ref, *args):
        w_refs = args[:num_layers]
        b_refs = args[num_layers:2 * num_layers]
        o_ref = args[2 * num_layers]

        t = pl.program_id(1)

        # Assemble the slab: [left halo | center tile | right halo] (bf16,
        # every piece is a multiple of 16 rows -> aligned concat).
        slab = jnp.concatenate(
            [xl_ref[0, tile_t - halo:, :], xc_ref[0], xr_ref[0, :halo, :]],
            axis=0)

        # Zero every slab row that falls outside the real sequence [0, seq_len):
        # this realizes Conv1d 'same' zero-padding and kills the clamped /
        # padded neighbor data at the sequence boundaries.
        row = jax.lax.broadcasted_iota(jnp.int32, (S, 1), 0)
        g = t * tile_t - halo + row
        valid = jnp.logical_and(g >= 0, g < seq_len)
        cur = jnp.where(valid, slab, jnp.zeros_like(slab))

        # All conv layers back-to-back on the VMEM-resident slab.  The halo
        # loses `pad` valid rows per layer; halo >= num_layers*pad, so the
        # central tile_t rows emitted at the end are exact.
        for l in range(num_layers):
            c_in, c_out = dims_p[l], dims_p[l + 1]
            if margin > 0:
                zeros_m = jnp.zeros((margin, c_in), cur.dtype)
                xp = jnp.concatenate([zeros_m, cur, zeros_m], axis=0)
            else:
                xp = cur
            # Accumulator initialized from the BN-folded bias (saves a VPU pass).
            acc = jnp.broadcast_to(b_refs[l][...], (S, c_out)).astype(jnp.float32)
            for k in range(K):  # K shifted bf16 matmuls on the MXU, f32 accum
                start = margin + k - pad
                acc = acc + jnp.dot(xp[start:start + S, :], w_refs[l][k],
                                    preferred_element_type=jnp.float32)
            if l < num_layers - 1:
                if acts[l]:
                    acc = jnp.tanh(acc)                 # EUP
                acc = jnp.where(valid, acc, 0.0)        # re-impose zero 'same' padding
                cur = acc.astype(jnp.bfloat16)          # bf16 feed for the next layer
            else:
                if acts[l]:
                    acc = jnp.tanh(acc)
                o_ref[0] = acc[halo:halo + tile_t, :].astype(o_ref.dtype)
        # TODO(synk): dropout is treated as eval-mode identity (no train mask).

    return kernel


def postnet_forward(params, inputs, *, tile_t_target=256):
    """inputs: (B, T, num_mels) -> (B, T, num_mels), mirroring PostNet.forward."""
    B, T, num_mels = inputs.shape
    L = len(params)
    K = params[0]["w"].shape[0]
    pad = (K - 1) // 2
    acts = tuple(bool(p["use_tanh"]) for p in params)

    # Per-layer channel dims, padded to the 128-lane width (lane-dense MXU/stores).
    dims = [params[0]["w"].shape[1]] + [p["w"].shape[2] for p in params]
    dims_p = tuple(_round_up(d, 128) for d in dims)
    c0p = dims_p[0]

    # Time tiling: ~tile_t_target rows per tile (16-row aligned) plus a halo of
    # >= L*pad rows on each side sourced from the neighboring tiles.
    halo = max(16, _round_up(L * pad, 16))
    n_t = max(1, _cdiv(T, tile_t_target))
    tile_t = max(halo, _round_up(_cdiv(T, n_t), 16))
    T_pad = _round_up(T, tile_t)
    nT = T_pad // tile_t
    last_block = nT - 1

    # Pad (time, channels) ONCE and cast activations to bf16 for the MXU.
    x = jnp.pad(inputs, ((0, 0), (0, T_pad - T), (0, c0p - dims[0])))
    x = x.astype(jnp.bfloat16)

    # Fold eval-mode BatchNorm1d into conv weights/bias, pad channels, cast bf16.
    ws, bs = [], []
    for li, p in enumerate(params):
        cin, cout = dims[li], dims[li + 1]
        cin_p, cout_p = dims_p[li], dims_p[li + 1]
        scale = p["gamma"] / jnp.sqrt(p["var"] + _EPS)                  # (cout,)
        w_f = (p["w"] * scale[None, None, :]).astype(jnp.float32)
        b_f = ((p["b"] - p["mean"]) * scale + p["beta"]).astype(jnp.float32)
        w_f = jnp.pad(w_f, ((0, 0), (0, cin_p - cin), (0, cout_p - cout)))
        b_f = jnp.pad(b_f, (0, cout_p - cout)).reshape(1, cout_p)
        ws.append(w_f.astype(jnp.bfloat16))
        bs.append(b_f)                                                  # bias stays f32

    kernel = _make_fused_kernel(L, K, tile_t, T, halo, dims_p, acts)

    in_specs = [
        # left neighbor / center / right neighbor input tiles (halo source)
        pl.BlockSpec((1, tile_t, c0p), lambda b, t: (b, jnp.maximum(t - 1, 0), 0)),
        pl.BlockSpec((1, tile_t, c0p), lambda b, t: (b, t, 0)),
        pl.BlockSpec((1, tile_t, c0p),
                     lambda b, t: (b, jnp.minimum(t + 1, last_block), 0)),
    ]
    # Whole weight / bias stacks with constant index maps -> fetched once and
    # kept VMEM-resident across all grid steps.
    in_specs += [pl.BlockSpec((K, dims_p[i], dims_p[i + 1]), lambda b, t: (0, 0, 0))
                 for i in range(L)]
    in_specs += [pl.BlockSpec((1, dims_p[i + 1]), lambda b, t: (0, 0))
                 for i in range(L)]

    out = pl.pallas_call(
        kernel,
        out_shape=jax.ShapeDtypeStruct((B, T_pad, dims_p[-1]), jnp.float32),
        grid=(B, nT),
        in_specs=in_specs,
        out_specs=pl.BlockSpec((1, tile_t, dims_p[-1]), lambda b, t: (b, t, 0)),
        compiler_params=pltpu.CompilerParams(
            dimension_semantics=("parallel", "parallel"),
            vmem_limit_bytes=48 * 1024 * 1024,   # safe for v7x's 64 MiB VMEM
        ),
    )(x, x, x, *ws, *bs)

    return out[:, :T, :num_mels]


def init_postnet_params(key, *, conv_layers, num_mels, num_channels, kernel_size):
    """Deterministic synthetic parameters matching PostNet.__init__ shapes."""
    assert conv_layers >= 2
    dims = [num_mels] + [num_channels] * (conv_layers - 1) + [num_mels]
    params = []
    for li in range(conv_layers):
        cin, cout = dims[li], dims[li + 1]
        k_w, k_b, k_g = jax.random.split(jax.random.fold_in(key, li), 3)
        w = 0.02 * jax.random.normal(k_w, (kernel_size, cin, cout), jnp.float32)
        b = 0.01 * jax.random.normal(k_b, (cout,), jnp.float32)
        gamma = 1.0 + 0.05 * jax.random.normal(k_g, (cout,), jnp.float32)
        beta = jnp.zeros((cout,), jnp.float32)
        mean = jnp.zeros((cout,), jnp.float32)   # BN running stats (eval mode)
        var = jnp.ones((cout,), jnp.float32)
        use_tanh = li < conv_layers - 1          # last layer: activation='none'
        params.append(dict(w=w, b=b, gamma=gamma, beta=beta, mean=mean,
                           var=var, use_tanh=use_tanh))
    return params


def postnet_reference(params, inputs):
    """Pure-JAX reference (mirrors the kernel's bf16 input/weight rounding)."""
    x = inputs.astype(jnp.float32)
    B, T, _ = inputs.shape
    for p in params:
        K = p["w"].shape[0]
        pad = (K - 1) // 2
        scale = p["gamma"] / jnp.sqrt(p["var"] + _EPS)
        w = (p["w"] * scale[None, None, :]).astype(jnp.bfloat16).astype(jnp.float32)
        b = (p["b"] - p["mean"]) * scale + p["beta"]
        xb = x.astype(jnp.bfloat16).astype(jnp.float32)
        xp = jnp.pad(xb, ((0, 0), (pad, pad), (0, 0)))
        acc = jnp.zeros((B, T, w.shape[2]), jnp.float32) + b
        for k in range(K):
            acc = acc + jnp.einsum("btc,cd->btd", xp[:, k:k + T, :], w[k],
                                   precision=jax.lax.Precision.HIGHEST)
        x = jnp.tanh(acc) if p["use_tanh"] else acc
    return x


if __name__ == "__main__":
    # Small shapes consistent with the module's forward (real PostNet defaults
    # are conv_layers=5, num_mels=80, num_channels=512, kernel_size=5).
    B, T = 2, 16
    conv_layers, num_mels, num_channels, kernel_size = 3, 16, 32, 5

    key = jax.random.PRNGKey(0)
    k_in, k_par = jax.random.split(key)
    x = jax.random.normal(k_in, (B, T, num_mels), jnp.float32)
    params = init_postnet_params(k_par, conv_layers=conv_layers,
                                 num_mels=num_mels, num_channels=num_channels,
                                 kernel_size=kernel_size)

    y = jax.block_until_ready(postnet_forward(params, x))
    assert y.shape == (B, T, num_mels), y.shape

    y_ref = jax.block_until_ready(postnet_reference(params, x))
    max_err = float(jnp.max(jnp.abs(y - y_ref)))
    assert max_err < 2e-2, f"kernel vs reference mismatch: max|err|={max_err}"
    print("KERNEL_OK")
</pallas_src>

<mosaic_0001>
module attributes {stable_mosaic.version = 11 : i64} {
  func.func @kernel(%arg0: i32, %arg1: i32, %arg2: memref<1x16x128xbf16, #tpu.memory_space<vmem>>, %arg3: memref<1x16x128xbf16, #tpu.memory_space<vmem>>, %arg4: memref<1x16x128xbf16, #tpu.memory_space<vmem>>, %arg5: memref<5x128x128xbf16, #tpu.memory_space<vmem>>, %arg6: memref<5x128x128xbf16, #tpu.memory_space<vmem>>, %arg7: memref<5x128x128xbf16, #tpu.memory_space<vmem>>, %arg8: memref<1x128xf32, #tpu.memory_space<vmem>>, %arg9: memref<1x128xf32, #tpu.memory_space<vmem>>, %arg10: memref<1x128xf32, #tpu.memory_space<vmem>>, %arg11: memref<1x16x128xf32, #tpu.memory_space<vmem>>) attributes {dimension_semantics = [#tpu.dimension_semantics<parallel>, #tpu.dimension_semantics<parallel>], iteration_bounds = array<i64: 2, 1>, scalar_prefetch = 0 : i64, scratch_operands = 0 : i64, tpu.core_type = #tpu.core_type<tc>, window_params = [{transform_indices = @transform_0, window_bounds = array<i64: 1, 16, 128>}, {transform_indices = @transform_1, window_bounds = array<i64: 1, 16, 128>}, {transform_indices = @transform_2, window_bounds = array<i64: 1, 16, 128>}, {pipeline_mode = #tpu.pipeline_mode<synchronous>, transform_indices = @transform_3, window_bounds = array<i64: 5, 128, 128>}, {pipeline_mode = #tpu.pipeline_mode<synchronous>, transform_indices = @transform_4, window_bounds = array<i64: 5, 128, 128>}, {pipeline_mode = #tpu.pipeline_mode<synchronous>, transform_indices = @transform_5, window_bounds = array<i64: 5, 128, 128>}, {pipeline_mode = #tpu.pipeline_mode<synchronous>, transform_indices = @transform_6, window_bounds = array<i64: 1, 128>}, {pipeline_mode = #tpu.pipeline_mode<synchronous>, transform_indices = @transform_7, window_bounds = array<i64: 1, 128>}, {pipeline_mode = #tpu.pipeline_mode<synchronous>, transform_indices = @transform_8, window_bounds = array<i64: 1, 128>}, {transform_indices = @transform_9, window_bounds = array<i64: 1, 16, 128>}]} {
    %c0 = arith.constant 0 : index
    %c0_0 = arith.constant 0 : index
    %c0_1 = arith.constant 0 : index
    %0 = vector.load %arg2[%c0, %c0_0, %c0_1] : memref<1x16x128xbf16, #tpu.memory_space<vmem>>, vector<1x16x128xbf16>
    %1 = vector.shape_cast %0 : vector<1x16x128xbf16> to vector<16x128xbf16>
    %c0_2 = arith.constant 0 : index
    %c0_3 = arith.constant 0 : index
    %c0_4 = arith.constant 0 : index
    %2 = vector.load %arg3[%c0_2, %c0_3, %c0_4] : memref<1x16x128xbf16, #tpu.memory_space<vmem>>, vector<1x16x128xbf16>
    %3 = vector.shape_cast %2 : vector<1x16x128xbf16> to vector<16x128xbf16>
    %c0_5 = arith.constant 0 : index
    %c0_6 = arith.constant 0 : index
    %c0_7 = arith.constant 0 : index
    %4 = vector.load %arg4[%c0_5, %c0_6, %c0_7] : memref<1x16x128xbf16, #tpu.memory_space<vmem>>, vector<1x16x128xbf16>
    %5 = vector.shape_cast %4 : vector<1x16x128xbf16> to vector<16x128xbf16>
    %6 = tpu.concatenate %1, %3, %5 in 0 : vector<16x128xbf16>, vector<16x128xbf16>, vector<16x128xbf16> -> vector<48x128xbf16>
    %7 = tpu.iota {dimensions = array<i32: 0>} : vector<48x1xi32>
    %c16_i32 = arith.constant 16 : i32
    %8 = arith.muli %arg1, %c16_i32 : i32
    %c16_i32_8 = arith.constant 16 : i32
    %9 = arith.subi %8, %c16_i32_8 : i32
    %10 = vector.broadcast %9 : i32 to vector<48x1xi32>
    %11 = arith.addi %10, %7 : vector<48x1xi32>
    %c0_i32 = arith.constant 0 : i32
    %12 = vector.broadcast %c0_i32 : i32 to vector<48x1xi32>
    %13 = arith.cmpi sge, %11, %12 : vector<48x1xi32>
    %c16_i32_9 = arith.constant 16 : i32
    %14 = vector.broadcast %c16_i32_9 : i32 to vector<48x1xi32>
    %15 = arith.cmpi slt, %11, %14 : vector<48x1xi32>
    %16 = arith.andi %13, %15 : vector<48x1xi1>
    %cst = arith.constant 0.000000e+00 : bf16
    %17 = vector.broadcast %cst : bf16 to vector<48x128xbf16>
    %18 = vector.shape_cast %16 : vector<48x1xi1> to vector<48x1xi1>
    %19 = vector.broadcast %18 : vector<48x1xi1> to vector<48x128xi1>
    %20 = arith.select %19, %6, %17 : vector<48x128xi1>, vector<48x128xbf16>
    %cst_10 = arith.constant 0.000000e+00 : bf16
    %21 = vector.broadcast %cst_10 : bf16 to vector<16x128xbf16>
    %22 = tpu.concatenate %21, %20, %21 in 0 : vector<16x128xbf16>, vector<48x128xbf16>, vector<16x128xbf16> -> vector<80x128xbf16>
    %c0_11 = arith.constant 0 : index
    %c0_12 = arith.constant 0 : index
    %23 = vector.load %arg8[%c0_11, %c0_12] : memref<1x128xf32, #tpu.memory_space<vmem>>, vector<1x128xf32>
    %24 = vector.shape_cast %23 : vector<1x128xf32> to vector<1x128xf32>
    %25 = vector.broadcast %24 : vector<1x128xf32> to vector<48x128xf32>
    %26 = vector.extract_strided_slice %22 {offsets = [14, 0], sizes = [48, 128], strides = [1, 1]} : vector<80x128xbf16> to vector<48x128xbf16>
    %c0_13 = arith.constant 0 : index
    %c0_14 = arith.constant 0 : index
    %c0_15 = arith.constant 0 : index
    %27 = vector.load %arg5[%c0_13, %c0_14, %c0_15] : memref<5x128x128xbf16, #tpu.memory_space<vmem>>, vector<1x128x128xbf16>
    %28 = vector.shape_cast %27 : vector<1x128x128xbf16> to vector<128x128xbf16>
    %cst_16 = arith.constant dense<0.000000e+00> : vector<48x128xf32>
    %29 = tpu.matmul %26, %28, %cst_16 {dimension_numbers = #tpu.dot_dimension_numbers<[1], [0], [0], [1], [0, 0, 1, 1], [], []>} : vector<48x128xbf16>, vector<128x128xbf16>, vector<48x128xf32> -> vector<48x128xf32>
    %30 = arith.addf %25, %29 : vector<48x128xf32>
    %31 = vector.extract_strided_slice %22 {offsets = [15, 0], sizes = [48, 128], strides = [1, 1]} : vector<80x128xbf16> to vector<48x128xbf16>
    %c1 = arith.constant 1 : index
    %c0_17 = arith.constant 0 : index
    %c0_18 = arith.constant 0 : index
    %32 = vector.load %arg5[%c1, %c0_17, %c0_18] : memref<5x128x128xbf16, #tpu.memory_space<vmem>>, vector<1x128x128xbf16>
    %33 = vector.shape_cast %32 : vector<1x128x128xbf16> to vector<128x128xbf16>
    %cst_19 = arith.constant dense<0.000000e+00> : vector<48x128xf32>
    %34 = tpu.matmul %31, %33, %cst_19 {dimension_numbers = #tpu.dot_dimension_numbers<[1], [0], [0], [1], [0, 0, 1, 1], [], []>} : vector<48x128xbf16>, vector<128x128xbf16>, vector<48x128xf32> -> vector<48x128xf32>
    %35 = arith.addf %30, %34 : vector<48x128xf32>
    %36 = vector.extract_strided_slice %22 {offsets = [16, 0], sizes = [48, 128], strides = [1, 1]} : vector<80x128xbf16> to vector<48x128xbf16>
    %c2 = arith.constant 2 : index
    %c0_20 = arith.constant 0 : index
    %c0_21 = arith.constant 0 : index
    %37 = vector.load %arg5[%c2, %c0_20, %c0_21] : memref<5x128x128xbf16, #tpu.memory_space<vmem>>, vector<1x128x128xbf16>
    %38 = vector.shape_cast %37 : vector<1x128x128xbf16> to vector<128x128xbf16>
    %cst_22 = arith.constant dense<0.000000e+00> : vector<48x128xf32>
    %39 = tpu.matmul %36, %38, %cst_22 {dimension_numbers = #tpu.dot_dimension_numbers<[1], [0], [0], [1], [0, 0, 1, 1], [], []>} : vector<48x128xbf16>, vector<128x128xbf16>, vector<48x128xf32> -> vector<48x128xf32>
    %40 = arith.addf %35, %39 : vector<48x128xf32>
    %41 = vector.extract_strided_slice %22 {offsets = [17, 0], sizes = [48, 128], strides = [1, 1]} : vector<80x128xbf16> to vector<48x128xbf16>
    %c3 = arith.constant 3 : index
    %c0_23 = arith.constant 0 : index
    %c0_24 = arith.constant 0 : index
    %42 = vector.load %arg5[%c3, %c0_23, %c0_24] : memref<5x128x128xbf16, #tpu.memory_space<vmem>>, vector<1x128x128xbf16>
    %43 = vector.shape_cast %42 : vector<1x128x128xbf16> to vector<128x128xbf16>
    %cst_25 = arith.constant dense<0.000000e+00> : vector<48x128xf32>
    %44 = tpu.matmul %41, %43, %cst_25 {dimension_numbers = #tpu.dot_dimension_numbers<[1], [0], [0], [1], [0, 0, 1, 1], [], []>} : vector<48x128xbf16>, vector<128x128xbf16>, vector<48x128xf32> -> vector<48x128xf32>
    %45 = arith.addf %40, %44 : vector<48x128xf32>
    %46 = vector.extract_strided_slice %22 {offsets = [18, 0], sizes = [48, 128], strides = [1, 1]} : vector<80x128xbf16> to vector<48x128xbf16>
    %c4 = arith.constant 4 : index
    %c0_26 = arith.constant 0 : index
    %c0_27 = arith.constant 0 : index
    %47 = vector.load %arg5[%c4, %c0_26, %c0_27] : memref<5x128x128xbf16, #tpu.memory_space<vmem>>, vector<1x128x128xbf16>
    %48 = vector.shape_cast %47 : vector<1x128x128xbf16> to vector<128x128xbf16>
    %cst_28 = arith.constant dense<0.000000e+00> : vector<48x128xf32>
    %49 = tpu.matmul %46, %48, %cst_28 {dimension_numbers = #tpu.dot_dimension_numbers<[1], [0], [0], [1], [0, 0, 1, 1], [], []>} : vector<48x128xbf16>, vector<128x128xbf16>, vector<48x128xf32> -> vector<48x128xf32>
    %50 = arith.addf %45, %49 : vector<48x128xf32>
    %51 = math.tanh %50 : vector<48x128xf32>
    %cst_29 = arith.constant 0.000000e+00 : f32
    %52 = vector.shape_cast %16 : vector<48x1xi1> to vector<48x1xi1>
    %53 = vector.broadcast %52 : vector<48x1xi1> to vector<48x128xi1>
    %54 = vector.broadcast %cst_29 : f32 to vector<48x128xf32>
    %55 = arith.select %53, %51, %54 : vector<48x128xi1>, vector<48x128xf32>
    %56 = arith.truncf %55 : vector<48x128xf32> to vector<48x128xbf16>
    %cst_30 = arith.constant 0.000000e+00 : bf16
    %57 = vector.broadcast %cst_30 : bf16 to vector<16x128xbf16>
    %58 = tpu.concatenate %57, %56, %57 in 0 : vector<16x128xbf16>, vector<48x128xbf16>, vector<16x128xbf16> -> vector<80x128xbf16>
    %c0_31 = arith.constant 0 : index
    %c0_32 = arith.constant 0 : index
    %59 = vector.load %arg9[%c0_31, %c0_32] : memref<1x128xf32, #tpu.memory_space<vmem>>, vector<1x128xf32>
    %60 = vector.shape_cast %59 : vector<1x128xf32> to vector<1x128xf32>
    %61 = vector.broadcast %60 : vector<1x128xf32> to vector<48x128xf32>
    %62 = vector.extract_strided_slice %58 {offsets = [14, 0], sizes = [48, 128], strides = [1, 1]} : vector<80x128xbf16> to vector<48x128xbf16>
    %c0_33 = arith.constant 0 : index
    %c0_34 = arith.constant 0 : index
    %c0_35 = arith.constant 0 : index
    %63 = vector.load %arg6[%c0_33, %c0_34, %c0_35] : memref<5x128x128xbf16, #tpu.memory_space<vmem>>, vector<1x128x128xbf16>
    %64 = vector.shape_cast %63 : vector<1x128x128xbf16> to vector<128x128xbf16>
    %cst_36 = arith.constant dense<0.000000e+00> : vector<48x128xf32>
    %65 = tpu.matmul %62, %64, %cst_36 {dimension_numbers = #tpu.dot_dimension_numbers<[1], [0], [0], [1], [0, 0, 1, 1], [], []>} : vector<48x128xbf16>, vector<128x128xbf16>, vector<48x128xf32> -> vector<48x128xf32>
    %66 = arith.addf %61, %65 : vector<48x128xf32>
    %67 = vector.extract_strided_slice %58 {offsets = [15, 0], sizes = [48, 128], strides = [1, 1]} : vector<80x128xbf16> to vector<48x128xbf16>
    %c1_37 = arith.constant 1 : index
    %c0_38 = arith.constant 0 : index
    %c0_39 = arith.constant 0 : index
    %68 = vector.load %arg6[%c1_37, %c0_38, %c0_39] : memref<5x128x128xbf16, #tpu.memory_space<vmem>>, vector<1x128x128xbf16>
    %69 = vector.shape_cast %68 : vector<1x128x128xbf16> to vector<128x128xbf16>
    %cst_40 = arith.constant dense<0.000000e+00> : vector<48x128xf32>
    %70 = tpu.matmul %67, %69, %cst_40 {dimension_numbers = #tpu.dot_dimension_numbers<[1], [0], [0], [1], [0, 0, 1, 1], [], []>} : vector<48x128xbf16>, vector<128x128xbf16>, vector<48x128xf32> -> vector<48x128xf32>
    %71 = arith.addf %66, %70 : vector<48x128xf32>
    %72 = vector.extract_strided_slice %58 {offsets = [16, 0], sizes = [48, 128], strides = [1, 1]} : vector<80x128xbf16> to vector<48x128xbf16>
    %c2_41 = arith.constant 2 : index
    %c0_42 = arith.constant 0 : index
    %c0_43 = arith.constant 0 : index
    %73 = vector.load %arg6[%c2_41, %c0_42, %c0_43] : memref<5x128x128xbf16, #tpu.memory_space<vmem>>, vector<1x128x128xbf16>
    %74 = vector.shape_cast %73 : vector<1x128x128xbf16> to vector<128x128xbf16>
    %cst_44 = arith.constant dense<0.000000e+00> : vector<48x128xf32>
    %75 = tpu.matmul %72, %74, %cst_44 {dimension_numbers = #tpu.dot_dimension_numbers<[1], [0], [0], [1], [0, 0, 1, 1], [], []>} : vector<48x128xbf16>, vector<128x128xbf16>, vector<48x128xf32> -> vector<48x128xf32>
    %76 = arith.addf %71, %75 : vector<48x128xf32>
    %77 = vector.extract_strided_slice %58 {offsets = [17, 0], sizes = [48, 128], strides = [1, 1]} : vector<80x128xbf16> to vector<48x128xbf16>
    %c3_45 = arith.constant 3 : index
    %c0_46 = arith.constant 0 : index
    %c0_47 = arith.constant 0 : index
    %78 = vector.load %arg6[%c3_45, %c0_46, %c0_47] : memref<5x128x128xbf16, #tpu.memory_space<vmem>>, vector<1x128x128xbf16>
    %79 = vector.shape_cast %78 : vector<1x128x128xbf16> to vector<128x128xbf16>
    %cst_48 = arith.constant dense<0.000000e+00> : vector<48x128xf32>
    %80 = tpu.matmul %77, %79, %cst_48 {dimension_numbers = #tpu.dot_dimension_numbers<[1], [0], [0], [1], [0, 0, 1, 1], [], []>} : vector<48x128xbf16>, vector<128x128xbf16>, vector<48x128xf32> -> vector<48x128xf32>
    %81 = arith.addf %76, %80 : vector<48x128xf32>
    %82 = vector.extract_strided_slice %58 {offsets = [18, 0], sizes = [48, 128], strides = [1, 1]} : vector<80x128xbf16> to vector<48x128xbf16>
    %c4_49 = arith.constant 4 : index
    %c0_50 = arith.constant 0 : index
    %c0_51 = arith.constant 0 : index
    %83 = vector.load %arg6[%c4_49, %c0_50, %c0_51] : memref<5x128x128xbf16, #tpu.memory_space<vmem>>, vector<1x128x128xbf16>
    %84 = vector.shape_cast %83 : vector<1x128x128xbf16> to vector<128x128xbf16>
    %cst_52 = arith.constant dense<0.000000e+00> : vector<48x128xf32>
    %85 = tpu.matmul %82, %84, %cst_52 {dimension_numbers = #tpu.dot_dimension_numbers<[1], [0], [0], [1], [0, 0, 1, 1], [], []>} : vector<48x128xbf16>, vector<128x128xbf16>, vector<48x128xf32> -> vector<48x128xf32>
    %86 = arith.addf %81, %85 : vector<48x128xf32>
    %87 = math.tanh %86 : vector<48x128xf32>
    %cst_53 = arith.constant 0.000000e+00 : f32
    %88 = vector.shape_cast %16 : vector<48x1xi1> to vector<48x1xi1>
    %89 = vector.broadcast %88 : vector<48x1xi1> to vector<48x128xi1>
    %90 = vector.broadcast %cst_53 : f32 to vector<48x128xf32>
    %91 = arith.select %89, %87, %90 : vector<48x128xi1>, vector<48x128xf32>
    %92 = arith.truncf %91 : vector<48x128xf32> to vector<48x128xbf16>
    %cst_54 = arith.constant 0.000000e+00 : bf16
    %93 = vector.broadcast %cst_54 : bf16 to vector<16x128xbf16>
    %94 = tpu.concatenate %93, %92, %93 in 0 : vector<16x128xbf16>, vector<48x128xbf16>, vector<16x128xbf16> -> vector<80x128xbf16>
    %c0_55 = arith.constant 0 : index
    %c0_56 = arith.constant 0 : index
    %95 = vector.load %arg10[%c0_55, %c0_56] : memref<1x128xf32, #tpu.memory_space<vmem>>, vector<1x128xf32>
    %96 = vector.shape_cast %95 : vector<1x128xf32> to vector<1x128xf32>
    %97 = vector.broadcast %96 : vector<1x128xf32> to vector<48x128xf32>
    %98 = vector.extract_strided_slice %94 {offsets = [14, 0], sizes = [48, 128], strides = [1, 1]} : vector<80x128xbf16> to vector<48x128xbf16>
    %c0_57 = arith.constant 0 : index
    %c0_58 = arith.constant 0 : index
    %c0_59 = arith.constant 0 : index
    %99 = vector.load %arg7[%c0_57, %c0_58, %c0_59] : memref<5x128x128xbf16, #tpu.memory_space<vmem>>, vector<1x128x128xbf16>
    %100 = vector.shape_cast %99 : vector<1x128x128xbf16> to vector<128x128xbf16>
    %cst_60 = arith.constant dense<0.000000e+00> : vector<48x128xf32>
    %101 = tpu.matmul %98, %100, %cst_60 {dimension_numbers = #tpu.dot_dimension_numbers<[1], [0], [0], [1], [0, 0, 1, 1], [], []>} : vector<48x128xbf16>, vector<128x128xbf16>, vector<48x128xf32> -> vector<48x128xf32>
    %102 = arith.addf %97, %101 : vector<48x128xf32>
    %103 = vector.extract_strided_slice %94 {offsets = [15, 0], sizes = [48, 128], strides = [1, 1]} : vector<80x128xbf16> to vector<48x128xbf16>
    %c1_61 = arith.constant 1 : index
    %c0_62 = arith.constant 0 : index
    %c0_63 = arith.constant 0 : index
    %104 = vector.load %arg7[%c1_61, %c0_62, %c0_63] : memref<5x128x128xbf16, #tpu.memory_space<vmem>>, vector<1x128x128xbf16>
    %105 = vector.shape_cast %104 : vector<1x128x128xbf16> to vector<128x128xbf16>
    %cst_64 = arith.constant dense<0.000000e+00> : vector<48x128xf32>
    %106 = tpu.matmul %103, %105, %cst_64 {dimension_numbers = #tpu.dot_dimension_numbers<[1], [0], [0], [1], [0, 0, 1, 1], [], []>} : vector<48x128xbf16>, vector<128x128xbf16>, vector<48x128xf32> -> vector<48x128xf32>
    %107 = arith.addf %102, %106 : vector<48x128xf32>
    %108 = vector.extract_strided_slice %94 {offsets = [16, 0], sizes = [48, 128], strides = [1, 1]} : vector<80x128xbf16> to vector<48x128xbf16>
    %c2_65 = arith.constant 2 : index
    %c0_66 = arith.constant 0 : index
    %c0_67 = arith.constant 0 : index
    %109 = vector.load %arg7[%c2_65, %c0_66, %c0_67] : memref<5x128x128xbf16, #tpu.memory_space<vmem>>, vector<1x128x128xbf16>
    %110 = vector.shape_cast %109 : vector<1x128x128xbf16> to vector<128x128xbf16>
    %cst_68 = arith.constant dense<0.000000e+00> : vector<48x128xf32>
    %111 = tpu.matmul %108, %110, %cst_68 {dimension_numbers = #tpu.dot_dimension_numbers<[1], [0], [0], [1], [0, 0, 1, 1], [], []>} : vector<48x128xbf16>, vector<128x128xbf16>, vector<48x128xf32> -> vector<48x128xf32>
    %112 = arith.addf %107, %111 : vector<48x128xf32>
    %113 = vector.extract_strided_slice %94 {offsets = [17, 0], sizes = [48, 128], strides = [1, 1]} : vector<80x128xbf16> to vector<48x128xbf16>
    %c3_69 = arith.constant 3 : index
    %c0_70 = arith.constant 0 : index
    %c0_71 = arith.constant 0 : index
    %114 = vector.load %arg7[%c3_69, %c0_70, %c0_71] : memref<5x128x128xbf16, #tpu.memory_space<vmem>>, vector<1x128x128xbf16>
    %115 = vector.shape_cast %114 : vector<1x128x128xbf16> to vector<128x128xbf16>
    %cst_72 = arith.constant dense<0.000000e+00> : vector<48x128xf32>
    %116 = tpu.matmul %113, %115, %cst_72 {dimension_numbers = #tpu.dot_dimension_numbers<[1], [0], [0], [1], [0, 0, 1, 1], [], []>} : vector<48x128xbf16>, vector<128x128xbf16>, vector<48x128xf32> -> vector<48x128xf32>
    %117 = arith.addf %112, %116 : vector<48x128xf32>
    %118 = vector.extract_strided_slice %94 {offsets = [18, 0], sizes = [48, 128], strides = [1, 1]} : vector<80x128xbf16> to vector<48x128xbf16>
    %c4_73 = arith.constant 4 : index
    %c0_74 = arith.constant 0 : index
    %c0_75 = arith.constant 0 : index
    %119 = vector.load %arg7[%c4_73, %c0_74, %c0_75] : memref<5x128x128xbf16, #tpu.memory_space<vmem>>, vector<1x128x128xbf16>
    %120 = vector.shape_cast %119 : vector<1x128x128xbf16> to vector<128x128xbf16>
    %cst_76 = arith.constant dense<0.000000e+00> : vector<48x128xf32>
    %121 = tpu.matmul %118, %120, %cst_76 {dimension_numbers = #tpu.dot_dimension_numbers<[1], [0], [0], [1], [0, 0, 1, 1], [], []>} : vector<48x128xbf16>, vector<128x128xbf16>, vector<48x128xf32> -> vector<48x128xf32>
    %122 = arith.addf %117, %121 : vector<48x128xf32>
    %123 = vector.extract_strided_slice %122 {offsets = [16, 0], sizes = [16, 128], strides = [1, 1]} : vector<48x128xf32> to vector<16x128xf32>
    %c0_77 = arith.constant 0 : index
    %c0_78 = arith.constant 0 : index
    %c0_79 = arith.constant 0 : index
    %124 = vector.load %arg11[%c0_77, %c0_78, %c0_79] : memref<1x16x128xf32, #tpu.memory_space<vmem>>, vector<1x16x128xf32>
    %125 = vector.shape_cast %124 : vector<1x16x128xf32> to vector<16x128xf32>
    %126 = vector.shape_cast %123 : vector<16x128xf32> to vector<1x16x128xf32>
    tpu.vector_store %arg11[%c0_77, %c0_78, %c0_79], %126 {strides = array<i32>} : memref<1x16x128xf32, #tpu.memory_space<vmem>>, vector<1x16x128xf32>,
    return
  }
  func.func @transform_0(%arg0: i32, %arg1: i32) -> (i32, i32, i32) {
    %c1_i32 = arith.constant 1 : i32
    %0 = arith.subi %arg1, %c1_i32 : i32
    %c0_i32 = arith.constant 0 : i32
    %1 = arith.maxsi %0, %c0_i32 : i32
    %c0_i32_0 = arith.constant 0 : i32
    %c0_i32_1 = arith.constant 0 : i32
    return %arg0, %1, %c0_i32_0 : i32, i32, i32
  }
  func.func @transform_1(%arg0: i32, %arg1: i32) -> (i32, i32, i32) {
    %c0_i32 = arith.constant 0 : i32
    %c0_i32_0 = arith.constant 0 : i32
    return %arg0, %arg1, %c0_i32 : i32, i32, i32
  }
  func.func @transform_2(%arg0: i32, %arg1: i32) -> (i32, i32, i32) {
    %c1_i32 = arith.constant 1 : i32
    %0 = arith.addi %arg1, %c1_i32 : i32
    %c0_i32 = arith.constant 0 : i32
    %1 = arith.minsi %0, %c0_i32 : i32
    %c0_i32_0 = arith.constant 0 : i32
    %c0_i32_1 = arith.constant 0 : i32
    return %arg0, %1, %c0_i32_0 : i32, i32, i32
  }
  func.func @transform_3(%arg0: i32, %arg1: i32) -> (i32, i32, i32) {
    %c0_i32 = arith.constant 0 : i32
    %c0_i32_0 = arith.constant 0 : i32
    %c0_i32_1 = arith.constant 0 : i32
    %c0_i32_2 = arith.constant 0 : i32
    return %c0_i32, %c0_i32_0, %c0_i32_1 : i32, i32, i32
  }
  func.func @transform_4(%arg0: i32, %arg1: i32) -> (i32, i32, i32) {
    %c0_i32 = arith.constant 0 : i32
    %c0_i32_0 = arith.constant 0 : i32
    %c0_i32_1 = arith.constant 0 : i32
    %c0_i32_2 = arith.constant 0 : i32
    return %c0_i32, %c0_i32_0, %c0_i32_1 : i32, i32, i32
  }
  func.func @transform_5(%arg0: i32, %arg1: i32) -> (i32, i32, i32) {
    %c0_i32 = arith.constant 0 : i32
    %c0_i32_0 = arith.constant 0 : i32
    %c0_i32_1 = arith.constant 0 : i32
    %c0_i32_2 = arith.constant 0 : i32
    return %c0_i32, %c0_i32_0, %c0_i32_1 : i32, i32, i32
  }
  func.func @transform_6(%arg0: i32, %arg1: i32) -> (i32, i32) {
    %c0_i32 = arith.constant 0 : i32
    %c0_i32_0 = arith.constant 0 : i32
    %c0_i32_1 = arith.constant 0 : i32
    return %c0_i32, %c0_i32_0 : i32, i32
  }
  func.func @transform_7(%arg0: i32, %arg1: i32) -> (i32, i32) {
    %c0_i32 = arith.constant 0 : i32
    %c0_i32_0 = arith.constant 0 : i32
    %c0_i32_1 = arith.constant 0 : i32
    return %c0_i32, %c0_i32_0 : i32, i32
  }
  func.func @transform_8(%arg0: i32, %arg1: i32) -> (i32, i32) {
    %c0_i32 = arith.constant 0 : i32
    %c0_i32_0 = arith.constant 0 : i32
    %c0_i32_1 = arith.constant 0 : i32
    return %c0_i32, %c0_i32_0 : i32, i32
  }
  func.func @transform_9(%arg0: i32, %arg1: i32) -> (i32, i32, i32) {
    %c0_i32 = arith.constant 0 : i32
    %c0_i32_0 = arith.constant 0 : i32
    return %arg0, %arg1, %c0_i32 : i32, i32, i32
  }
}

</mosaic_0001>

<llo_original>
// kernel: tpu_custom_call.1
$region0: #{tpu_custom_call.1}
  #allocation0 [shape = 'u32[]', space=smem, size = 0x4, offset = 0x4, fixed_abs, tag = 'smem constant byte address 0x4 - core index']
  #allocation1 [shape = 'u32[144,128]{1,0:T(1,128)}', space=vmem, size = 0x12000, scoped, tag = 'internal scratch']
  %s0 = inlined_call_operand.hbm [shape: bf16[2,16,128], index: 0, kind: input, shape index: {}]
  %s1 = inlined_call_operand.hbm [shape: bf16[2,16,128], index: 1, kind: input, shape index: {}]
  %s2 = inlined_call_operand.hbm [shape: bf16[2,16,128], index: 2, kind: input, shape index: {}]
  %s3 = inlined_call_operand.hbm [shape: bf16[5,128,128], index: 3, kind: input, shape index: {}]
  %s4 = inlined_call_operand.hbm [shape: bf16[5,128,128], index: 4, kind: input, shape index: {}]
  %s5 = inlined_call_operand.hbm [shape: bf16[5,128,128], index: 5, kind: input, shape index: {}]
  %s6 = inlined_call_operand.vmem [shape: f32[1,128], index: 6, kind: input, shape index: {}]
  %s7 = inlined_call_operand.vmem [shape: f32[1,128], index: 7, kind: input, shape index: {}]
  %s8 = inlined_call_operand.vmem [shape: f32[1,128], index: 8, kind: input, shape index: {}]
  %s9 = inlined_call_operand.hbm [shape: f32[2,16,128], index: 9, kind: output, shape index: {}]
  %s10 = sld [smem:[#allocation0]]
  $region93: #{tpu_custom_call.1} parent=0
    _
  %s12 = ssub.s32 1, %s10
  %s13 = scalar_select 0, %s12, %s10
  $region1: #{tpu_custom_call.1} parent=0
    #allocation2 [shape = 'u8[8192]{0}', space=vmem, size = 0x2000, scoped, tag = 'input window, operand 0']
    #allocation3 [shape = 's32[2]{0}', space=sflag, size = 0x8, scoped, tag = 'scoped memory for tpu_custom_call.1']
    #allocation4 [shape = 's32[2]{0}', space=sflag, size = 0x8, scoped, tag = 'scoped memory for tpu_custom_call.1']
    #allocation5 [shape = 'u8[8192]{0}', space=vmem, size = 0x2000, scoped, tag = 'input window, operand 1']
    #allocation6 [shape = 's32[2]{0}', space=sflag, size = 0x8, scoped, tag = 'scoped memory for tpu_custom_call.1']
    #allocation7 [shape = 'u8[8192]{0}', space=vmem, size = 0x2000, scoped, tag = 'input window, operand 2']
    #allocation8 [shape = 'u8[163840]{0}', space=vmem, size = 0x28000, scoped, tag = 'input window, operand 3, single buffered']
    #allocation9 [shape = 's32[1]{0}', space=sflag, size = 0x4, scoped, tag = 'scoped memory for tpu_custom_call.1']
    #allocation10 [shape = 'u8[163840]{0}', space=vmem, size = 0x28000, scoped, tag = 'input window, operand 4, single buffered']
    #allocation11 [shape = 'u8[163840]{0}', space=vmem, size = 0x28000, scoped, tag = 'input window, operand 5, single buffered']
    #allocation12 [shape = 's32[1]{0}', space=sflag, size = 0x4, scoped, tag = 'scoped memory for tpu_custom_call.1']
    #allocation13 [shape = 'u8[16384]{0}', space=vmem, size = 0x4000, scoped, tag = 'output window, operand 0']
    %14 = vsyncpa [#allocation3], 0
    %s15 = scalar_lea.sflag [#allocation3], 1
    %16 = vsyncpa %s15, 0
    %17 = vsyncpa [#allocation6], 0
    %s18 = scalar_lea.sflag [#allocation6], 1
    %19 = vsyncpa %s18, 0
    %20 = vsyncpa [#allocation9], 0
    %21 = vsyncpa [#allocation12], 0
    %22 = vsyncpa [#allocation4], 0
    %s23 = scalar_lea.sflag [#allocation4], 1
    %24 = vsyncpa %s23, 0
    loop: start=0, step=1, limit=4
    $region2: #{tpu_custom_call.1} parent=1 // loop_pre_header
      _
    $region3: #{tpu_custom_call.1} parent=1 // loop_header
      %s26 = sphi 0, %s30
      %p27 = scmp.ge.s32.totalorder %s26, 4
      %s33 = sphi 0, %s45
      %s34 = sphi 0, %s41
      %s35 = sphi 0, %s33
      %s36 = sphi 0, %s34
      %s37 = sphi 0, %s35
      %s38 = sphi 0, %s36
      %s56 = sphi 0, %s58
      %s59 = sphi 0, %s56
      %s60 = sphi 0, %s59
      %s76 = sphi 0, %s60
      %s84 = sphi 0, %s86
      %s87 = sphi 0, %s84
      %s88 = sphi 0, %s87
      %s104 = sphi 0, %s88
      %s118 = sphi 0, %s120
      %s121 = sphi 0, %s118
      %s122 = sphi 0, %s121
      %s138 = sphi 0, %s122
      %s142 = sphi 0, %s142
      %s144 = sphi 0, %s142
      %s145 = sphi 0, %s144
      %s159 = sphi 0, %s145
      %s163 = sphi 0, %s163
      %s165 = sphi 0, %s163
      %s166 = sphi 0, %s165
      %s180 = sphi 0, %s166
      %s184 = sphi 0, %s184
      %s186 = sphi 0, %s184
      %s187 = sphi 0, %s186
      %s201 = sphi 0, %s187
      %s205 = sphi 0, %s205
      %s207 = sphi 0, %s205
      %s208 = sphi 0, %s207
      %s222 = sphi 0, %s208
      %s226 = sphi 0, %s226
      %s228 = sphi 0, %s226
      %s229 = sphi 0, %s228
      %s243 = sphi 0, %s229
      %s247 = sphi 0, %s247
      %s249 = sphi 0, %s247
      %s250 = sphi 0, %s249
      %s264 = sphi 0, %s250
      %s272 = sphi 0, %s274
      %s275 = sphi 0, %s272
      %s276 = sphi 0, %s275
      %s292 = sphi 0, %s276
    $region4: #{tpu_custom_call.1} parent=1 // loop_header_branch
      %29 = sbr.rel (%p27) target = $region8
    $region5: #{tpu_custom_call.1} parent=1 // loop_body
      %s31 = ssub.s32 %s26, 1
      %s32 = ssub.s32 %s26, 2
      %s39 = sadd.s32 1, %s34
      %p40 = scmp.ge.s32.totalorder %s39, 1
      %s41 = scalar_select %p40, 0, %s39
      %s42 = sadd.s32 1, %s33
      %s43 = scalar_select %p40, %s42, %s33
      %p44 = scmp.ge.s32.totalorder %s43, 2
      %s45 = scalar_select %p44, 0, %s43
      %s46 = ssub.s32 %s34, 1
      %p47 = scmp.gt.s32.totalorder %s46, 0
      %s48 = scalar_select %p47, %s46, 0
      %s49 = ssub.s32 %s41, 1
      %p50 = scmp.gt.s32.totalorder %s49, 0
      %s51 = scalar_select %p50, %s49, 0
      %s52 = ssub.s32 %s33, %s45
      %s53 = ssub.s32 %s48, %s51
      %s54 = sor.u32 %s52, %s53
      %p55 = scmp.eq.s32.totalorder %s54, 0
      %s57 = sadd.s32 %s56, 1
      %s58 = scalar_select %p55, %s56, %s57
      %p61 = pneg %p55
      %p62 = scmp.eq.s32.totalorder %s26, 1
      %p63 = por %p61, %p62
      %p64 = scmp.ne.s32.totalorder %s56, %s59
      %p65 = scmp.eq.s32.totalorder %s26, 0
      %p66 = por %p64, %p65
      %p67 = scmp.ne.s32.totalorder %s56, %s59
      %p68 = scmp.eq.s32.totalorder %s31, 1
      %p69 = por %p67, %p68
      %p70 = scmp.ne.s32.totalorder %s59, %s60
      %p71 = scmp.eq.s32.totalorder %s31, 0
      %p72 = por %p70, %p71
      %p73 = scmp.ne.s32.totalorder %s59, %s60
      %p74 = scmp.eq.s32.totalorder %s32, 1
      %p75 = por %p73, %p74
      %p77 = scmp.ne.s32.totalorder %s60, %s76
      %p78 = scmp.eq.s32.totalorder %s32, 0
      %p79 = por %p77, %p78
      %s80 = ssub.s32 %s33, %s45
      %s81 = ssub.s32 %s34, %s41
      %s82 = sor.u32 %s80, %s81
      %p83 = scmp.eq.s32.totalorder %s82, 0
      %s85 = sadd.s32 %s84, 1
      %s86 = scalar_select %p83, %s84, %s85
      %p89 = pneg %p83
      %p90 = scmp.eq.s32.totalorder %s26, 1
      %p91 = por %p89, %p90
      %p92 = scmp.ne.s32.totalorder %s84, %s87
      %p93 = scmp.eq.s32.totalorder %s26, 0
      %p94 = por %p92, %p93
      %p95 = scmp.ne.s32.totalorder %s84, %s87
      %p96 = scmp.eq.s32.totalorder %s31, 1
      %p97 = por %p95, %p96
      %p98 = scmp.ne.s32.totalorder %s87, %s88
      %p99 = scmp.eq.s32.totalorder %s31, 0
      %p100 = por %p98, %p99
      %p101 = scmp.ne.s32.totalorder %s87, %s88
      %p102 = scmp.eq.s32.totalorder %s32, 1
      %p103 = por %p101, %p102
      %p105 = scmp.ne.s32.totalorder %s88, %s104
      %p106 = scmp.eq.s32.totalorder %s32, 0
      %p107 = por %p105, %p106
      %s108 = sadd.s32 %s34, 1
      %p109 = scmp.lt.s32.totalorder %s108, 0
      %s110 = scalar_select %p109, %s108, 0
      %s111 = sadd.s32 %s41, 1
      %p112 = scmp.lt.s32.totalorder %s111, 0
      %s113 = scalar_select %p112, %s111, 0
      %s114 = ssub.s32 %s33, %s45
      %s115 = ssub.s32 %s110, %s113
      %s116 = sor.u32 %s114, %s115
      %p117 = scmp.eq.s32.totalorder %s116, 0
      %s119 = sadd.s32 %s118, 1
      %s120 = scalar_select %p117, %s118, %s119
      %p123 = pneg %p117
      %p124 = scmp.eq.s32.totalorder %s26, 1
      %p125 = por %p123, %p124
      %p126 = scmp.ne.s32.totalorder %s118, %s121
      %p127 = scmp.eq.s32.totalorder %s26, 0
      %p128 = por %p126, %p127
      %p129 = scmp.ne.s32.totalorder %s118, %s121
      %p130 = scmp.eq.s32.totalorder %s31, 1
      %p131 = por %p129, %p130
      %p132 = scmp.ne.s32.totalorder %s121, %s122
      %p133 = scmp.eq.s32.totalorder %s31, 0
      %p134 = por %p132, %p133
      %p135 = scmp.ne.s32.totalorder %s121, %s122
      %p136 = scmp.eq.s32.totalorder %s32, 1
      %p137 = por %p135, %p136
      %p139 = scmp.ne.s32.totalorder %s122, %s138
      %p140 = scmp.eq.s32.totalorder %s32, 0
      %p141 = por %p139, %p140
      %s143 = sadd.s32 %s142, 1
      %p146 = scmp.eq.s32.totalorder %s26, 1
      %p147 = scmp.ne.s32.totalorder %s142, %s144
      %p148 = scmp.eq.s32.totalorder %s26, 0
      %p149 = por %p147, %p148
      %p150 = scmp.ne.s32.totalorder %s142, %s144
      %p151 = scmp.eq.s32.totalorder %s31, 1
      %p152 = por %p150, %p151
      %p153 = scmp.ne.s32.totalorder %s144, %s145
      %p154 = scmp.eq.s32.totalorder %s31, 0
      %p155 = por %p153, %p154
      %p156 = scmp.ne.s32.totalorder %s144, %s145
      %p157 = scmp.eq.s32.totalorder %s32, 1
      %p158 = por %p156, %p157
      %p160 = scmp.ne.s32.totalorder %s145, %s159
      %p161 = scmp.eq.s32.totalorder %s32, 0
      %p162 = por %p160, %p161
      %s164 = sadd.s32 %s163, 1
      %p167 = scmp.eq.s32.totalorder %s26, 1
      %p168 = scmp.ne.s32.totalorder %s163, %s165
      %p169 = scmp.eq.s32.totalorder %s26, 0
      %p170 = por %p168, %p169
      %p171 = scmp.ne.s32.totalorder %s163, %s165
      %p172 = scmp.eq.s32.totalorder %s31, 1
      %p173 = por %p171, %p172
      %p174 = scmp.ne.s32.totalorder %s165, %s166
      %p175 = scmp.eq.s32.totalorder %s31, 0
      %p176 = por %p174, %p175
      %p177 = scmp.ne.s32.totalorder %s165, %s166
      %p178 = scmp.eq.s32.totalorder %s32, 1
      %p179 = por %p177, %p178
      %p181 = scmp.ne.s32.totalorder %s166, %s180
      %p182 = scmp.eq.s32.totalorder %s32, 0
      %p183 = por %p181, %p182
      %s185 = sadd.s32 %s184, 1
      %p188 = scmp.eq.s32.totalorder %s26, 1
      %p189 = scmp.ne.s32.totalorder %s184, %s186
      %p190 = scmp.eq.s32.totalorder %s26, 0
      %p191 = por %p189, %p190
      %p192 = scmp.ne.s32.totalorder %s184, %s186
      %p193 = scmp.eq.s32.totalorder %s31, 1
      %p194 = por %p192, %p193
      %p195 = scmp.ne.s32.totalorder %s186, %s187
      %p196 = scmp.eq.s32.totalorder %s31, 0
      %p197 = por %p195, %p196
      %p198 = scmp.ne.s32.totalorder %s186, %s187
      %p199 = scmp.eq.s32.totalorder %s32, 1
      %p200 = por %p198, %p199
      %p202 = scmp.ne.s32.totalorder %s187, %s201
      %p203 = scmp.eq.s32.totalorder %s32, 0
      %p204 = por %p202, %p203
      %s206 = sadd.s32 %s205, 1
      %p209 = scmp.eq.s32.totalorder %s26, 1
      %p210 = scmp.ne.s32.totalorder %s205, %s207
      %p211 = scmp.eq.s32.totalorder %s26, 0
      %p212 = por %p210, %p211
      %p213 = scmp.ne.s32.totalorder %s205, %s207
      %p214 = scmp.eq.s32.totalorder %s31, 1
      %p215 = por %p213, %p214
      %p216 = scmp.ne.s32.totalorder %s207, %s208
      %p217 = scmp.eq.s32.totalorder %s31, 0
      %p218 = por %p216, %p217
      %p219 = scmp.ne.s32.totalorder %s207, %s208
      %p220 = scmp.eq.s32.totalorder %s32, 1
      %p221 = por %p219, %p220
      %p223 = scmp.ne.s32.totalorder %s208, %s222
      %p224 = scmp.eq.s32.totalorder %s32, 0
      %p225 = por %p223, %p224
      %s227 = sadd.s32 %s226, 1
      %p230 = scmp.eq.s32.totalorder %s26, 1
      %p231 = scmp.ne.s32.totalorder %s226, %s228
      %p232 = scmp.eq.s32.totalorder %s26, 0
      %p233 = por %p231, %p232
      %p234 = scmp.ne.s32.totalorder %s226, %s228
      %p235 = scmp.eq.s32.totalorder %s31, 1
      %p236 = por %p234, %p235
      %p237 = scmp.ne.s32.totalorder %s228, %s229
      %p238 = scmp.eq.s32.totalorder %s31, 0
      %p239 = por %p237, %p238
      %p240 = scmp.ne.s32.totalorder %s228, %s229
      %p241 = scmp.eq.s32.totalorder %s32, 1
      %p242 = por %p240, %p241
      %p244 = scmp.ne.s32.totalorder %s229, %s243
      %p245 = scmp.eq.s32.totalorder %s32, 0
      %p246 = por %p244, %p245
      %s248 = sadd.s32 %s247, 1
      %p251 = scmp.eq.s32.totalorder %s26, 1
      %p252 = scmp.ne.s32.totalorder %s247, %s249
      %p253 = scmp.eq.s32.totalorder %s26, 0
      %p254 = por %p252, %p253
      %p255 = scmp.ne.s32.totalorder %s247, %s249
      %p256 = scmp.eq.s32.totalorder %s31, 1
      %p257 = por %p255, %p256
      %p258 = scmp.ne.s32.totalorder %s249, %s250
      %p259 = scmp.eq.s32.totalorder %s31, 0
      %p260 = por %p258, %p259
      %p261 = scmp.ne.s32.totalorder %s249, %s250
      %p262 = scmp.eq.s32.totalorder %s32, 1
      %p263 = por %p261, %p262
      %p265 = scmp.ne.s32.totalorder %s250, %s264
      %p266 = scmp.eq.s32.totalorder %s32, 0
      %p267 = por %p265, %p266
      %s268 = ssub.s32 %s33, %s45
      %s269 = ssub.s32 %s34, %s41
      %s270 = sor.u32 %s268, %s269
      %p271 = scmp.eq.s32.totalorder %s270, 0
      %s273 = sadd.s32 %s272, 1
      %s274 = scalar_select %p271, %s272, %s273
      %p277 = pneg %p271
      %p278 = scmp.eq.s32.totalorder %s26, 1
      %p279 = por %p277, %p278
      %p280 = scmp.ne.s32.totalorder %s272, %s275
      %p281 = scmp.eq.s32.totalorder %s26, 0
      %p282 = por %p280, %p281
      %p283 = scmp.ne.s32.totalorder %s272, %s275
      %p284 = scmp.eq.s32.totalorder %s31, 1
      %p285 = por %p283, %p284
      %p286 = scmp.ne.s32.totalorder %s275, %s276
      %p287 = scmp.eq.s32.totalorder %s31, 0
      %p288 = por %p286, %p287
      %p289 = scmp.ne.s32.totalorder %s275, %s276
      %p290 = scmp.eq.s32.totalorder %s32, 1
      %p291 = por %p289, %p290
      %p293 = scmp.ne.s32.totalorder %s276, %s292
      %p294 = scmp.eq.s32.totalorder %s32, 0
      %p295 = por %p293, %p294
      %p296 = scmp.le.s32.totalorder 1, %s26
      %p297 = scmp.lt.s32.totalorder %s26, 3
      %p298 = pnand %p296, %p297
      %p299 = pneg %p298
      // Predicated region
      $region9: #{tpu_custom_call.1} parent=5 // pred_check
        _
      $region10: #{tpu_custom_call.1} parent=5 // pred_check_branch
        %301 = sbr.rel (%p298) target = $region12
      $region11: #{tpu_custom_call.1} parent=5 // pred_region
        %s302 = ssub.s32 %s26, 1
        // Predicated region
        $region13: #{tpu_custom_call.1} parent=11 // pred_check
          %p303 = pneg %p155
        $region14: #{tpu_custom_call.1} parent=11 // pred_check_branch
          %305 = sbr.rel (%p303) target = $region16
        $region15: #{tpu_custom_call.1} parent=11 // pred_region
          %s307 = ssub.s32 5120, 5120
          %308 = vsyncadd [#allocation9], %s307
          %s309 = sshll.u32 [#allocation8], 4
          %s310 = int_to_ptr.vmem [resolvable:$true] %s309
          %315 = dma.hbm_to_vmem [thread:$0]  %s3, 5120, %s310, [#allocation9], 64, 64, 4
        $region16: #{tpu_custom_call.1} parent=11 // pred_fallthru
          _
        // Predicated region
        $region17: #{tpu_custom_call.1} parent=11 // pred_check
          %p316 = pneg %p176
        $region18: #{tpu_custom_call.1} parent=11 // pred_check_branch
          %318 = sbr.rel (%p316) target = $region20
        $region19: #{tpu_custom_call.1} parent=11 // pred_region
          %s320 = ssub.s32 5120, 5120
          %321 = vsyncadd [#allocation9], %s320
          %s322 = sshll.u32 [#allocation10], 4
          %s323 = int_to_ptr.vmem [resolvable:$true] %s322
          %328 = dma.hbm_to_vmem [thread:$0]  %s4, 5120, %s323, [#allocation9], 64, 64, 4
        $region20: #{tpu_custom_call.1} parent=11 // pred_fallthru
          _
        // Predicated region
        $region21: #{tpu_custom_call.1} parent=11 // pred_check
          %p329 = pneg %p197
        $region22: #{tpu_custom_call.1} parent=11 // pred_check_branch
          %331 = sbr.rel (%p329) target = $region24
        $region23: #{tpu_custom_call.1} parent=11 // pred_region
          %s333 = ssub.s32 5120, 5120
          %334 = vsyncadd [#allocation12], %s333
          %s335 = sshll.u32 [#allocation11], 4
          %s336 = int_to_ptr.vmem [resolvable:$true] %s335
          %341 = dma.hbm_to_vmem [thread:$0]  %s5, 5120, %s336, [#allocation12], 64, 64, 4
        $region24: #{tpu_custom_call.1} parent=11 // pred_fallthru
          _
        // Predicated region
        $region25: #{tpu_custom_call.1} parent=11 // pred_check
          %p342 = pneg %p218
        $region26: #{tpu_custom_call.1} parent=11 // pred_check_branch
          %344 = sbr.rel (%p342) target = $region28
        $region27: #{tpu_custom_call.1} parent=11 // pred_region
          _
        $region28: #{tpu_custom_call.1} parent=11 // pred_fallthru
          _
        // Predicated region
        $region29: #{tpu_custom_call.1} parent=11 // pred_check
          %p345 = pneg %p239
        $region30: #{tpu_custom_call.1} parent=11 // pred_check_branch
          %347 = sbr.rel (%p345) target = $region32
        $region31: #{tpu_custom_call.1} parent=11 // pred_region
          _
        $region32: #{tpu_custom_call.1} parent=11 // pred_fallthru
          _
        // Predicated region
        $region33: #{tpu_custom_call.1} parent=11 // pred_check
          %p348 = pneg %p260
        $region34: #{tpu_custom_call.1} parent=11 // pred_check_branch
          %350 = sbr.rel (%p348) target = $region36
        $region35: #{tpu_custom_call.1} parent=11 // pred_region
          _
        $region36: #{tpu_custom_call.1} parent=11 // pred_fallthru
          _
      $region12: #{tpu_custom_call.1} parent=5 // pred_fallthru
        _
      %p351 = scmp.lt.s32.totalorder %s26, 2
      // Predicated region
      $region37: #{tpu_custom_call.1} parent=5 // pred_check
        %p352 = pneg %p351
      $region38: #{tpu_custom_call.1} parent=5 // pred_check_branch
        %354 = sbr.rel (%p352) target = $region40
      $region39: #{tpu_custom_call.1} parent=5 // pred_region
        // Predicated region
        $region41: #{tpu_custom_call.1} parent=39 // pred_check
          %p355 = pneg %p66
        $region42: #{tpu_custom_call.1} parent=39 // pred_check_branch
          %357 = sbr.rel (%p355) target = $region44
        $region43: #{tpu_custom_call.1} parent=39 // pred_region
          %s358 = sand.u32 %s56, 1
          %s359 = scalar_lea.sflag [#allocation3], %s358
          %s360 = sand.u32 %s56, 1
          %s361 = smul.addr %s360, 8
          %s362 = scalar_lea.vmem [#allocation2], %s361
          %s363 = ssub.s32 %s34, 1
          %p364 = scmp.gt.s32.totalorder %s363, 0
          %s365 = scalar_select %p364, %s363, 0
          %s366 = smul.u32 2, %s365
          %s368 = ssub.s32 128, 128
          %369 = vsyncadd %s359, %s368
          %s370 = smul.addr %s33, 2
          %s371 = sadd.s32 %s366, %s370
          %s372 = smul.addr %s371, 64
          %s373 = scalar_lea.hbm %s0, %s372
          %s374 = sshll.u32 %s362, 4
          %s375 = int_to_ptr.vmem [resolvable:$true] %s374
          %380 = dma.hbm_to_vmem [thread:$0]  %s373, 128, %s375, %s359, 64, 64, 4
        $region44: #{tpu_custom_call.1} parent=39 // pred_fallthru
          _
        // Predicated region
        $region45: #{tpu_custom_call.1} parent=39 // pred_check
          %p381 = pneg %p94
        $region46: #{tpu_custom_call.1} parent=39 // pred_check_branch
          %383 = sbr.rel (%p381) target = $region48
        $region47: #{tpu_custom_call.1} parent=39 // pred_region
          %s384 = sand.u32 %s26, 1
          %s385 = scalar_lea.sflag [#allocation6], %s384
          %s386 = sand.u32 %s84, 1
          %s387 = smul.addr %s386, 8
          %s388 = scalar_lea.vmem [#allocation5], %s387
          %s389 = smul.u32 2, %s34
          %s391 = ssub.s32 128, 128
          %392 = vsyncadd %s385, %s391
          %s393 = smul.addr %s33, 2
          %s394 = sadd.s32 %s389, %s393
          %s395 = smul.addr %s394, 64
          %s396 = scalar_lea.hbm %s1, %s395
          %s397 = sshll.u32 %s388, 4
          %s398 = int_to_ptr.vmem [resolvable:$true] %s397
          %403 = dma.hbm_to_vmem [thread:$0]  %s396, 128, %s398, %s385, 64, 64, 4
        $region48: #{tpu_custom_call.1} parent=39 // pred_fallthru
          _
        // Predicated region
        $region49: #{tpu_custom_call.1} parent=39 // pred_check
          %p404 = pneg %p128
        $region50: #{tpu_custom_call.1} parent=39 // pred_check_branch
          %406 = sbr.rel (%p404) target = $region52
        $region51: #{tpu_custom_call.1} parent=39 // pred_region
          %s407 = sand.u32 %s26, 1
          %s408 = scalar_lea.sflag [#allocation6], %s407
          %s409 = sand.u32 %s118, 1
          %s410 = smul.addr %s409, 8
          %s411 = scalar_lea.vmem [#allocation7], %s410
          %s412 = sadd.s32 %s34, 1
          %p413 = scmp.lt.s32.totalorder %s412, 0
          %s414 = scalar_select %p413, %s412, 0
          %s415 = smul.u32 2, %s414
          %s417 = ssub.s32 128, 128
          %418 = vsyncadd %s408, %s417
          %s419 = smul.addr %s33, 2
          %s420 = sadd.s32 %s415, %s419
          %s421 = smul.addr %s420, 64
          %s422 = scalar_lea.hbm %s2, %s421
          %s423 = sshll.u32 %s411, 4
          %s424 = int_to_ptr.vmem [resolvable:$true] %s423
          %429 = dma.hbm_to_vmem [thread:$0]  %s422, 128, %s424, %s408, 64, 64, 4
        $region52: #{tpu_custom_call.1} parent=39 // pred_fallthru
          _
      $region40: #{tpu_custom_call.1} parent=5 // pred_fallthru
        _
      %p430 = scmp.le.s32.totalorder 1, %s26
      %p431 = scmp.lt.s32.totalorder %s26, 3
      %p432 = pnand %p430, %p431
      %p433 = pneg %p432
      // Predicated region
      $region53: #{tpu_custom_call.1} parent=5 // pred_check
        _
      $region54: #{tpu_custom_call.1} parent=5 // pred_check_branch
        %435 = sbr.rel (%p432) target = $region56
      $region55: #{tpu_custom_call.1} parent=5 // pred_region
        %s436 = ssub.s32 %s26, 1
        %s437 = sand.u32 %s59, 1
        %s438 = scalar_lea.sflag [#allocation3], %s437
        %s439 = sand.u32 %s59, 1
        %s440 = smul.addr %s439, 8
        %s441 = scalar_lea.vmem [#allocation2], %s440
        // Predicated region
        $region57: #{tpu_custom_call.1} parent=55 // pred_check
          %p442 = pneg %p72
        $region58: #{tpu_custom_call.1} parent=55 // pred_check_branch
          %444 = sbr.rel (%p442) target = $region60
        $region59: #{tpu_custom_call.1} parent=55 // pred_region
          %445 = dma.done %s438, 128
        $region60: #{tpu_custom_call.1} parent=55 // pred_fallthru
          _
        %s446 = sand.u32 %s31, 1
        %s447 = scalar_lea.sflag [#allocation6], %s446
        %s448 = sand.u32 %s87, 1
        %s449 = smul.addr %s448, 8
        %s450 = scalar_lea.vmem [#allocation5], %s449
        // Predicated region
        $region61: #{tpu_custom_call.1} parent=55 // pred_check
          %p451 = pneg %p100
        $region62: #{tpu_custom_call.1} parent=55 // pred_check_branch
          %453 = sbr.rel (%p451) target = $region64
        $region63: #{tpu_custom_call.1} parent=55 // pred_region
          %454 = dma.done %s447, 128
        $region64: #{tpu_custom_call.1} parent=55 // pred_fallthru
          _
        %s455 = sand.u32 %s31, 1
        %s456 = scalar_lea.sflag [#allocation6], %s455
        %s457 = sand.u32 %s121, 1
        %s458 = smul.addr %s457, 8
        %s459 = scalar_lea.vmem [#allocation7], %s458
        // Predicated region
        $region65: #{tpu_custom_call.1} parent=55 // pred_check
          %p460 = pneg %p134
        $region66: #{tpu_custom_call.1} parent=55 // pred_check_branch
          %462 = sbr.rel (%p460) target = $region68
        $region67: #{tpu_custom_call.1} parent=55 // pred_region
          %463 = dma.done %s456, 128
        $region68: #{tpu_custom_call.1} parent=55 // pred_fallthru
          _
        // Predicated region
        $region69: #{tpu_custom_call.1} parent=55 // pred_check
          %p464 = pneg %p155
        $region70: #{tpu_custom_call.1} parent=55 // pred_check_branch
          %466 = sbr.rel (%p464) target = $region72
        $region71: #{tpu_custom_call.1} parent=55 // pred_region
          %467 = dma.done [#allocation9], 5120
        $region72: #{tpu_custom_call.1} parent=55 // pred_fallthru
          _
        // Predicated region
        $region73: #{tpu_custom_call.1} parent=55 // pred_check
          %p468 = pneg %p176
        $region74: #{tpu_custom_call.1} parent=55 // pred_check_branch
          %470 = sbr.rel (%p468) target = $region76
        $region75: #{tpu_custom_call.1} parent=55 // pred_region
          %471 = dma.done [#allocation9], 5120
        $region76: #{tpu_custom_call.1} parent=55 // pred_fallthru
          _
        // Predicated region
        $region77: #{tpu_custom_call.1} parent=55 // pred_check
          %p472 = pneg %p197
        $region78: #{tpu_custom_call.1} parent=55 // pred_check_branch
          %474 = sbr.rel (%p472) target = $region80
        $region79: #{tpu_custom_call.1} parent=55 // pred_region
          %475 = dma.done [#allocation12], 5120
        $region80: #{tpu_custom_call.1} parent=55 // pred_fallthru
          _
        %s476 = sand.u32 %s59, 1
        %s477 = scalar_lea.sflag [#allocation3], %s476
        %s478 = sand.u32 %s59, 1
        %s479 = smul.addr %s478, 8
        %s480 = scalar_lea.vmem [#allocation2], %s479
        %p481 = pneg %p72
        %p482 = pneg %p69
        %s483 = sand.u32 %s31, 1
        %s484 = scalar_lea.sflag [#allocation6], %s483
        %s485 = sand.u32 %s87, 1
        %s486 = smul.addr %s485, 8
        %s487 = scalar_lea.vmem [#allocation5], %s486
        %p488 = pneg %p100
        %p489 = pneg %p97
        %s490 = sand.u32 %s31, 1
        %s491 = scalar_lea.sflag [#allocation6], %s490
        %s492 = sand.u32 %s121, 1
        %s493 = smul.addr %s492, 8
        %s494 = scalar_lea.vmem [#allocation7], %s493
        %p495 = pneg %p134
        %p496 = pneg %p131
        %p497 = pneg %p155
        %p498 = pneg %p152
        %p499 = pneg %p176
        %p500 = pneg %p173
        %p501 = pneg %p197
        %p502 = pneg %p194
        %p503 = pneg %p218
        %p504 = pneg %p215
        %p505 = pneg %p239
        %p506 = pneg %p236
        %p507 = pneg %p260
        %p508 = pneg %p257
        %p509 = pneg %p288
        %p510 = pneg %p285
        %s511 = sand.u32 %s275, 1
        %s512 = scalar_lea.sflag [#allocation4], %s511
        %s513 = sand.u32 %s275, 1
        %s514 = smul.addr %s513, 16
        %s515 = scalar_lea.vmem [#allocation13], %s514
        %s516 = ssub.s32 %s36, 1
        %p517 = scmp.gt.s32.totalorder %s516, 0
        %s518 = scalar_select %p517, %s516, 0
        %s519 = smul.u32 2, %s518
        %s520 = smul.u32 2, %s36
        %s521 = sadd.s32 %s36, 1
        %p522 = scmp.lt.s32.totalorder %s521, 0
        %s523 = scalar_select %p522, %s521, 0
        %s524 = smul.u32 2, %s523
        %s525 = smul.u32 2, %s36
        %v529 = vld [vmem:[%s441] sm:$0xf]
        %v530 = vld [vmem:[%s441 + $0x4] sm:$0xf]
        %v531 = vld [vmem:[%s450] sm:$0xf]
        %v532 = vld [vmem:[%s450 + $0x4] sm:$0xf]
        %v533 = vld [vmem:[%s459] sm:$0xf]
        %v534 = vld [vmem:[%s459 + $0x4] sm:$0xf]
        %v537 = vunpack.c.l.b16 %v529
        %v538 = vunpack.c.l.b16 %v530
        %v539 = vpack.c.b16 %v538, %v537
        %v543 = vunpack.c.l.b16 %v531
        %v544 = vunpack.c.l.b16 %v532
        %v545 = vpack.c.b16 %v544, %v543
        %v549 = vunpack.c.l.b16 %v533
        %v550 = vunpack.c.l.b16 %v534
        %v551 = vpack.c.b16 %v550, %v549
        %v553 = vlaneseq
        %v554 = vshrl.u32 %v553, 7
        %v555 = vadd.s32 %v554, 8
        %v556 = vadd.s32 %v554, 16
        %v557 = vadd.s32 %v554, 24
        %v558 = vadd.s32 %v554, 32
        %v559 = vadd.s32 %v554, 40
        %s560 = smul.u32 %s36, 16
        %s561 = ssub.s32 %s560, 16
        %v562 = vstv %s561
        %v563 = vadd.s32 %v562, %v554
        %v564 = vadd.s32 %v562, %v555
        %v565 = vadd.s32 %v562, %v556
        %v566 = vadd.s32 %v562, %v557
        %v567 = vadd.s32 %v562, %v558
        %v568 = vadd.s32 %v562, %v559
        %vm569 = vcmp.ge.s32.totalorder %v563, 0
        %vm570 = vcmp.ge.s32.totalorder %v564, 0
        %vm571 = vcmp.ge.s32.totalorder %v565, 0
        %vm572 = vcmp.ge.s32.totalorder %v566, 0
        %vm573 = vcmp.ge.s32.totalorder %v567, 0
        %vm574 = vcmp.ge.s32.totalorder %v568, 0
        %vm575 = vcmp.lt.s32.totalorder %v563, 16
        %vm576 = vcmp.lt.s32.totalorder %v564, 16
        %vm577 = vcmp.lt.s32.totalorder %v565, 16
        %vm578 = vcmp.lt.s32.totalorder %v566, 16
        %vm579 = vcmp.lt.s32.totalorder %v567, 16
        %vm580 = vcmp.lt.s32.totalorder %v568, 16
        %vm581 = vmand %vm569, %vm575
        %vm582 = vmand %vm570, %vm576
        %vm583 = vmand %vm571, %vm577
        %vm584 = vmand %vm572, %vm578
        %vm585 = vmand %vm573, %vm579
        %vm586 = vmand %vm574, %vm580
        %v587 = vsel %vm581, 1, 0
        %v588 = vsel %vm582, 1, 0
        %v589 = vsel %vm583, 1, 0
        %v590 = vsel %vm584, 1, 0
        %v591 = vsel %vm585, 1, 0
        %v592 = vsel %vm586, 1, 0
        %vm593 = vcmp.eq.s32.totalorder %v587, 1
        %vm594 = vcmp.eq.s32.totalorder %v588, 1
        %vm595 = vcmp.eq.s32.totalorder %v589, 1
        %vm596 = vcmp.eq.s32.totalorder %v590, 1
        %vm597 = vcmp.eq.s32.totalorder %v591, 1
        %vm598 = vcmp.eq.s32.totalorder %v592, 1
        %vm599 = vmpackc.low %vm593, %vm593
        %vm600 = vmpackc.low %vm594, %vm594
        %vm601 = vmpackc.low %vm595, %vm595
        %vm602 = vmpackc.low %vm596, %vm596
        %vm603 = vmpackc.low %vm597, %vm597
        %vm604 = vmpackc.low %vm598, %vm598
        %v605 = vsel %vm599, 65537, 0
        %v606 = vsel %vm600, 65537, 0
        %v607 = vsel %vm601, 65537, 0
        %v608 = vsel %vm602, 65537, 0
        %v609 = vsel %vm603, 65537, 0
        %v610 = vsel %vm604, 65537, 0
        %v611 = vunpack.c.l.b16 %v605
        %v612 = vunpack.c.l.b16 %v606
        %v613 = vunpack.c.l.b16 %v607
        %v614 = vunpack.c.l.b16 %v608
        %v615 = vunpack.c.l.b16 %v609
        %v616 = vunpack.c.l.b16 %v610
        %v617 = vpack.c.b16 %v612, %v611
        %v618 = vpack.c.b16 %v614, %v613
        %v619 = vpack.c.b16 %v616, %v615
        %vm620 = vcmp.ne.s16.totalorder %v617, 0
        %vm621 = vcmp.ne.s16.totalorder %v618, 0
        %vm622 = vcmp.ne.s16.totalorder %v619, 0
        %v623 = vsel %vm620, %v539, 0
        %v624 = vsel %vm621, %v545, 0
        %v625 = vsel %vm622, %v551, 0
        %v626 = vld [vmem:[%s6] sm:$0x1]
        %v628 = vlaneseq
        %v629 = vshrl.u32 %v628, 7
        %v630 = vsub.s32 0, %v629
        %v631 = vrot.slane %v626, %v630
        %v633 = vld [vmem:[#allocation8] sm:$0xf]
        %v634 = vld [vmem:[#allocation8 + $0x4] sm:$0xf]
        %v635 = vld [vmem:[#allocation8 + $0x8] sm:$0xf]
        %v636 = vld [vmem:[#allocation8 + $0xc] sm:$0xf]
        %v637 = vld [vmem:[#allocation8 + $0x10] sm:$0xf]
        %v638 = vld [vmem:[#allocation8 + $0x14] sm:$0xf]
        %v639 = vld [vmem:[#allocation8 + $0x18] sm:$0xf]
        %v640 = vld [vmem:[#allocation8 + $0x1c] sm:$0xf]
        %v641 = vld [vmem:[#allocation8 + $0x20] sm:$0xf]
        %v642 = vld [vmem:[#allocation8 + $0x24] sm:$0xf]
        %v643 = vld [vmem:[#allocation8 + $0x28] sm:$0xf]
        %v644 = vld [vmem:[#allocation8 + $0x2c] sm:$0xf]
        %v645 = vld [vmem:[#allocation8 + $0x30] sm:$0xf]
        %v646 = vld [vmem:[#allocation8 + $0x34] sm:$0xf]
        %v647 = vld [vmem:[#allocation8 + $0x38] sm:$0xf]
        %v648 = vld [vmem:[#allocation8 + $0x3c] sm:$0xf]
        %vm653 = vcmask 1040384
        %v654 = vrot.slane 0, 7
        %v655 = vrot.slane %v623, 7
        %v656 = vsel %vm653, %v654, %v655
        %v657 = vrot.slane %v624, 7
        %v658 = vsel %vm653, %v655, %v657
        %v659 = vrot.slane %v625, 7
        %v660 = vsel %vm653, %v657, %v659
        %v680 = vunpack.c.l.b16 %v633
        %v681 = vunpack.c.l.b16 %v634
        %v682 = vunpack.c.l.b16 %v635
        %v683 = vunpack.c.l.b16 %v636
        %v684 = vunpack.c.l.b16 %v637
        %v685 = vunpack.c.l.b16 %v638
        %v686 = vunpack.c.l.b16 %v639
        %v687 = vunpack.c.l.b16 %v640
        %v688 = vunpack.c.l.b16 %v641
        %v689 = vunpack.c.l.b16 %v642
        %v690 = vunpack.c.l.b16 %v643
        %v691 = vunpack.c.l.b16 %v644
        %v692 = vunpack.c.l.b16 %v645
        %v693 = vunpack.c.l.b16 %v646
        %v694 = vunpack.c.l.b16 %v647
        %v695 = vunpack.c.l.b16 %v648
        %v696 = vpack.c.b16 %v681, %v680
        %v697 = vpack.c.b16 %v683, %v682
        %v698 = vpack.c.b16 %v685, %v684
        %v699 = vpack.c.b16 %v687, %v686
        %v700 = vpack.c.b16 %v689, %v688
        %v701 = vpack.c.b16 %v691, %v690
        %v702 = vpack.c.b16 %v693, %v692
        %v703 = vpack.c.b16 %v695, %v694
        %712 = vmatprep.subr.bf16.mxu0 0
        %713 = vmatpush1.bf16.msra.mxu0 %v696
        %714 = vmatprep.subr.bf16.mxu0 0
        %715 = vmatpush1.bf16.msra.mxu0 %v697
        %716 = vmatprep.subr.bf16.mxu0 0
        %717 = vmatpush1.bf16.msra.mxu0 %v698
        %718 = vmatprep.subr.bf16.mxu0 0
        %719 = vmatpush1.bf16.msra.mxu0 %v699
        %720 = vmatprep.subr.bf16.mxu0 0
        %721 = vmatpush1.bf16.msra.mxu0 %v700
        %722 = vmatprep.subr.bf16.mxu0 0
        %723 = vmatpush1.bf16.msra.mxu0 %v701
        %724 = vmatprep.subr.bf16.mxu0 0
        %725 = vmatpush1.bf16.msra.mxu0 %v702
        %726 = vmatprep.subr.bf16.mxu0 0
        %727 = vmatpush1.bf16.msra.mxu0 %v703
        %728 = vmatprep.subr.bf16.mxu0 0
        %729 = vmatpush1.bf16.msra.mxu0 0
        %730 = vmatprep.subr.bf16.mxu0 0
        %731 = vmatpush1.bf16.msra.mxu0 0
        %732 = vmatprep.subr.bf16.mxu0 0
        %733 = vmatpush1.bf16.msra.mxu0 0
        %734 = vmatprep.subr.bf16.mxu0 0
        %735 = vmatpush1.bf16.msra.mxu0 0
        %736 = vmatprep.subr.bf16.mxu0 0
        %737 = vmatpush1.bf16.msra.mxu0 0
        %738 = vmatprep.subr.bf16.mxu0 0
        %739 = vmatpush1.bf16.msra.mxu0 0
        %740 = vmatprep.subr.bf16.mxu0 0
        %741 = vmatpush1.bf16.msra.mxu0 0
        %742 = vmatprep.subr.bf16.mxu0 0
        %743 = vmatpush1.bf16.msra.mxu0 0
        %744 = vmatprep.mubr.bf16.mxu0 0
        %745 = vmatmul.mubr.bf16.gmra.mrb[0].mxu0 %v656
        %v746 = vpop.f32.mrb[0].mxu0
        %v747 = vadd.f32 0.0, %v746
        %v748 = vpop.f32.mrb[0].mxu0
        %v749 = vpop.f32.mrb[0].mxu0
        %v750 = vadd.f32 0.0, %v749
        %v751 = vpop.f32.mrb[0].mxu0
        %752 = vmatprep.mubr.bf16.mxu0 0
        %753 = vmatmul.mubr.bf16.gmra.mrb[0].mxu0 %v658
        %v754 = vpop.f32.mrb[0].mxu0
        %v755 = vadd.f32 0.0, %v754
        %v756 = vpop.f32.mrb[0].mxu0
        %v757 = vpop.f32.mrb[0].mxu0
        %v758 = vadd.f32 0.0, %v757
        %v759 = vpop.f32.mrb[0].mxu0
        %760 = vmatprep.mubr.bf16.mxu0 0
        %761 = vmatmul.mubr.bf16.gmra.mrb[0].mxu0 %v660
        %v762 = vpop.f32.mrb[0].mxu0
        %v763 = vadd.f32 0.0, %v762
        %v764 = vpop.f32.mrb[0].mxu0
        %v765 = vpop.f32.mrb[0].mxu0
        %v766 = vadd.f32 0.0, %v765
        %v767 = vpop.f32.mrb[0].mxu0
        %768 = vdwg.mxu0
        %v769 = vadd.f32 %v631, %v747
        %v770 = vadd.f32 %v631, %v750
        %v771 = vadd.f32 %v631, %v755
        %v772 = vadd.f32 %v631, %v758
        %v773 = vadd.f32 %v631, %v763
        %v774 = vadd.f32 %v631, %v766
        %s775 = scalar_lea.vmem [#allocation8], 64
        %v776 = vld [vmem:[%s775] sm:$0xf]
        %v777 = vld [vmem:[%s775 + $0x4] sm:$0xf]
        %v778 = vld [vmem:[%s775 + $0x8] sm:$0xf]
        %v779 = vld [vmem:[%s775 + $0xc] sm:$0xf]
        %v780 = vld [vmem:[%s775 + $0x10] sm:$0xf]
        %v781 = vld [vmem:[%s775 + $0x14] sm:$0xf]
        %v782 = vld [vmem:[%s775 + $0x18] sm:$0xf]
        %v783 = vld [vmem:[%s775 + $0x1c] sm:$0xf]
        %v784 = vld [vmem:[%s775 + $0x20] sm:$0xf]
        %v785 = vld [vmem:[%s775 + $0x24] sm:$0xf]
        %v786 = vld [vmem:[%s775 + $0x28] sm:$0xf]
        %v787 = vld [vmem:[%s775 + $0x2c] sm:$0xf]
        %v788 = vld [vmem:[%s775 + $0x30] sm:$0xf]
        %v789 = vld [vmem:[%s775 + $0x34] sm:$0xf]
        %v790 = vld [vmem:[%s775 + $0x38] sm:$0xf]
        %v791 = vld [vmem:[%s775 + $0x3c] sm:$0xf]
        %vm792 = vsmask.f32 256
        %v794 = vshrl.u32 0, 16
        %v796 = vrot.slane %v794, 7
        %v798 = vshrl.u32 %v623, 16
        %v800 = vrot.slane %v798, 7
        %v801 = vshll.u32 %v623, 16
        %v803 = vor.u32 %v800, %v801
        %v804 = vsel %vm792, %v796, %v803
        %v806 = vshrl.u32 %v624, 16
        %v808 = vrot.slane %v806, 7
        %v809 = vshll.u32 %v624, 16
        %v811 = vor.u32 %v808, %v809
        %v812 = vsel %vm792, %v800, %v811
        %v814 = vshrl.u32 %v625, 16
        %v816 = vrot.slane %v814, 7
        %v817 = vshll.u32 %v625, 16
        %v819 = vor.u32 %v816, %v817
        %v820 = vsel %vm792, %v808, %v819
        %v840 = vunpack.c.l.b16 %v776
        %v841 = vunpack.c.l.b16 %v777
        %v842 = vunpack.c.l.b16 %v778
        %v843 = vunpack.c.l.b16 %v779
        %v844 = vunpack.c.l.b16 %v780
        %v845 = vunpack.c.l.b16 %v781
        %v846 = vunpack.c.l.b16 %v782
        %v847 = vunpack.c.l.b16 %v783
        %v848 = vunpack.c.l.b16 %v784
        %v849 = vunpack.c.l.b16 %v785
        %v850 = vunpack.c.l.b16 %v786
        %v851 = vunpack.c.l.b16 %v787
        %v852 = vunpack.c.l.b16 %v788
        %v853 = vunpack.c.l.b16 %v789
        %v854 = vunpack.c.l.b16 %v790
        %v855 = vunpack.c.l.b16 %v791
        %v856 = vpack.c.b16 %v841, %v840
        %v857 = vpack.c.b16 %v843, %v842
        %v858 = vpack.c.b16 %v845, %v844
        %v859 = vpack.c.b16 %v847, %v846
        %v860 = vpack.c.b16 %v849, %v848
        %v861 = vpack.c.b16 %v851, %v850
        %v862 = vpack.c.b16 %v853, %v852
        %v863 = vpack.c.b16 %v855, %v854
        %872 = vmatprep.subr.bf16.mxu0 0
        %873 = vmatpush1.bf16.msra.mxu0 %v856
        %874 = vmatprep.subr.bf16.mxu0 0
        %875 = vmatpush1.bf16.msra.mxu0 %v857
        %876 = vmatprep.subr.bf16.mxu0 0
        %877 = vmatpush1.bf16.msra.mxu0 %v858
        %878 = vmatprep.subr.bf16.mxu0 0
        %879 = vmatpush1.bf16.msra.mxu0 %v859
        %880 = vmatprep.subr.bf16.mxu0 0
        %881 = vmatpush1.bf16.msra.mxu0 %v860
        %882 = vmatprep.subr.bf16.mxu0 0
        %883 = vmatpush1.bf16.msra.mxu0 %v861
        %884 = vmatprep.subr.bf16.mxu0 0
        %885 = vmatpush1.bf16.msra.mxu0 %v862
        %886 = vmatprep.subr.bf16.mxu0 0
        %887 = vmatpush1.bf16.msra.mxu0 %v863
        %888 = vmatprep.subr.bf16.mxu0 0
        %889 = vmatpush1.bf16.msra.mxu0 0
        %890 = vmatprep.subr.bf16.mxu0 0
        %891 = vmatpush1.bf16.msra.mxu0 0
        %892 = vmatprep.subr.bf16.mxu0 0
        %893 = vmatpush1.bf16.msra.mxu0 0
        %894 = vmatprep.subr.bf16.mxu0 0
        %895 = vmatpush1.bf16.msra.mxu0 0
        %896 = vmatprep.subr.bf16.mxu0 0
        %897 = vmatpush1.bf16.msra.mxu0 0
        %898 = vmatprep.subr.bf16.mxu0 0
        %899 = vmatpush1.bf16.msra.mxu0 0
        %900 = vmatprep.subr.bf16.mxu0 0
        %901 = vmatpush1.bf16.msra.mxu0 0
        %902 = vmatprep.subr.bf16.mxu0 0
        %903 = vmatpush1.bf16.msra.mxu0 0
        %904 = vmatprep.mubr.bf16.mxu0 0
        %905 = vmatmul.mubr.bf16.gmra.mrb[0].mxu0 %v804
        %v906 = vpop.f32.mrb[0].mxu0
        %v907 = vadd.f32 0.0, %v906
        %v908 = vpop.f32.mrb[0].mxu0
        %v909 = vpop.f32.mrb[0].mxu0
        %v910 = vadd.f32 0.0, %v909
        %v911 = vpop.f32.mrb[0].mxu0
        %912 = vmatprep.mubr.bf16.mxu0 0
        %913 = vmatmul.mubr.bf16.gmra.mrb[0].mxu0 %v812
        %v914 = vpop.f32.mrb[0].mxu0
        %v915 = vadd.f32 0.0, %v914
        %v916 = vpop.f32.mrb[0].mxu0
        %v917 = vpop.f32.mrb[0].mxu0
        %v918 = vadd.f32 0.0, %v917
        %v919 = vpop.f32.mrb[0].mxu0
        %920 = vmatprep.mubr.bf16.mxu0 0
        %921 = vmatmul.mubr.bf16.gmra.mrb[0].mxu0 %v820
        %v922 = vpop.f32.mrb[0].mxu0
        %v923 = vadd.f32 0.0, %v922
        %v924 = vpop.f32.mrb[0].mxu0
        %v925 = vpop.f32.mrb[0].mxu0
        %v926 = vadd.f32 0.0, %v925
        %v927 = vpop.f32.mrb[0].mxu0
        %928 = vdwg.mxu0
        %v929 = vadd.f32 %v769, %v907
        %v930 = vadd.f32 %v770, %v910
        %v931 = vadd.f32 %v771, %v915
        %v932 = vadd.f32 %v772, %v918
        %v933 = vadd.f32 %v773, %v923
        %v934 = vadd.f32 %v774, %v926
        %s935 = scalar_lea.vmem [#allocation8], 128
        %v936 = vld [vmem:[%s935] sm:$0xf]
        %v937 = vld [vmem:[%s935 + $0x4] sm:$0xf]
        %v938 = vld [vmem:[%s935 + $0x8] sm:$0xf]
        %v939 = vld [vmem:[%s935 + $0xc] sm:$0xf]
        %v940 = vld [vmem:[%s935 + $0x10] sm:$0xf]
        %v941 = vld [vmem:[%s935 + $0x14] sm:$0xf]
        %v942 = vld [vmem:[%s935 + $0x18] sm:$0xf]
        %v943 = vld [vmem:[%s935 + $0x1c] sm:$0xf]
        %v944 = vld [vmem:[%s935 + $0x20] sm:$0xf]
        %v945 = vld [vmem:[%s935 + $0x24] sm:$0xf]
        %v946 = vld [vmem:[%s935 + $0x28] sm:$0xf]
        %v947 = vld [vmem:[%s935 + $0x2c] sm:$0xf]
        %v948 = vld [vmem:[%s935 + $0x30] sm:$0xf]
        %v949 = vld [vmem:[%s935 + $0x34] sm:$0xf]
        %v950 = vld [vmem:[%s935 + $0x38] sm:$0xf]
        %v951 = vld [vmem:[%s935 + $0x3c] sm:$0xf]
        %v968 = vunpack.c.l.b16 %v936
        %v969 = vunpack.c.l.b16 %v937
        %v970 = vunpack.c.l.b16 %v938
        %v971 = vunpack.c.l.b16 %v939
        %v972 = vunpack.c.l.b16 %v940
        %v973 = vunpack.c.l.b16 %v941
        %v974 = vunpack.c.l.b16 %v942
        %v975 = vunpack.c.l.b16 %v943
        %v976 = vunpack.c.l.b16 %v944
        %v977 = vunpack.c.l.b16 %v945
        %v978 = vunpack.c.l.b16 %v946
        %v979 = vunpack.c.l.b16 %v947
        %v980 = vunpack.c.l.b16 %v948
        %v981 = vunpack.c.l.b16 %v949
        %v982 = vunpack.c.l.b16 %v950
        %v983 = vunpack.c.l.b16 %v951
        %v984 = vpack.c.b16 %v969, %v968
        %v985 = vpack.c.b16 %v971, %v970
        %v986 = vpack.c.b16 %v973, %v972
        %v987 = vpack.c.b16 %v975, %v974
        %v988 = vpack.c.b16 %v977, %v976
        %v989 = vpack.c.b16 %v979, %v978
        %v990 = vpack.c.b16 %v981, %v980
        %v991 = vpack.c.b16 %v983, %v982
        %1000 = vmatprep.subr.bf16.mxu0 0
        %1001 = vmatpush1.bf16.msra.mxu0 %v984
        %1002 = vmatprep.subr.bf16.mxu0 0
        %1003 = vmatpush1.bf16.msra.mxu0 %v985
        %1004 = vmatprep.subr.bf16.mxu0 0
        %1005 = vmatpush1.bf16.msra.mxu0 %v986
        %1006 = vmatprep.subr.bf16.mxu0 0
        %1007 = vmatpush1.bf16.msra.mxu0 %v987
        %1008 = vmatprep.subr.bf16.mxu0 0
        %1009 = vmatpush1.bf16.msra.mxu0 %v988
        %1010 = vmatprep.subr.bf16.mxu0 0
        %1011 = vmatpush1.bf16.msra.mxu0 %v989
        %1012 = vmatprep.subr.bf16.mxu0 0
        %1013 = vmatpush1.bf16.msra.mxu0 %v990
        %1014 = vmatprep.subr.bf16.mxu0 0
        %1015 = vmatpush1.bf16.msra.mxu0 %v991
        %1016 = vmatprep.subr.bf16.mxu0 0
        %1017 = vmatpush1.bf16.msra.mxu0 0
        %1018 = vmatprep.subr.bf16.mxu0 0
        %1019 = vmatpush1.bf16.msra.mxu0 0
        %1020 = vmatprep.subr.bf16.mxu0 0
        %1021 = vmatpush1.bf16.msra.mxu0 0
        %1022 = vmatprep.subr.bf16.mxu0 0
        %1023 = vmatpush1.bf16.msra.mxu0 0
        %1024 = vmatprep.subr.bf16.mxu0 0
        %1025 = vmatpush1.bf16.msra.mxu0 0
        %1026 = vmatprep.subr.bf16.mxu0 0
        %1027 = vmatpush1.bf16.msra.mxu0 0
        %1028 = vmatprep.subr.bf16.mxu0 0
        %1029 = vmatpush1.bf16.msra.mxu0 0
        %1030 = vmatprep.subr.bf16.mxu0 0
        %1031 = vmatpush1.bf16.msra.mxu0 0
        %1032 = vmatprep.mubr.bf16.mxu0 0
        %1033 = vmatmul.mubr.bf16.gmra.mrb[0].mxu0 %v623
        %v1034 = vpop.f32.mrb[0].mxu0
        %v1035 = vadd.f32 0.0, %v1034
        %v1036 = vpop.f32.mrb[0].mxu0
        %v1037 = vpop.f32.mrb[0].mxu0
        %v1038 = vadd.f32 0.0, %v1037
        %v1039 = vpop.f32.mrb[0].mxu0
        %1040 = vmatprep.mubr.bf16.mxu0 0
        %1041 = vmatmul.mubr.bf16.gmra.mrb[0].mxu0 %v624
        %v1042 = vpop.f32.mrb[0].mxu0
        %v1043 = vadd.f32 0.0, %v1042
        %v1044 = vpop.f32.mrb[0].mxu0
        %v1045 = vpop.f32.mrb[0].mxu0
        %v1046 = vadd.f32 0.0, %v1045
        %v1047 = vpop.f32.mrb[0].mxu0
        %1048 = vmatprep.mubr.bf16.mxu0 0
        %1049 = vmatmul.mubr.bf16.gmra.mrb[0].mxu0 %v625
        %v1050 = vpop.f32.mrb[0].mxu0
        %v1051 = vadd.f32 0.0, %v1050
        %v1052 = vpop.f32.mrb[0].mxu0
        %v1053 = vpop.f32.mrb[0].mxu0
        %v1054 = vadd.f32 0.0, %v1053
        %v1055 = vpop.f32.mrb[0].mxu0
        %1056 = vdwg.mxu0
        %v1057 = vadd.f32 %v929, %v1035
        %v1058 = vadd.f32 %v930, %v1038
        %v1059 = vadd.f32 %v931, %v1043
        %v1060 = vadd.f32 %v932, %v1046
        %v1061 = vadd.f32 %v933, %v1051
        %v1062 = vadd.f32 %v934, %v1054
        %s1063 = scalar_lea.vmem [#allocation8], 192
        %v1064 = vld [vmem:[%s1063] sm:$0xf]
        %v1065 = vld [vmem:[%s1063 + $0x4] sm:$0xf]
        %v1066 = vld [vmem:[%s1063 + $0x8] sm:$0xf]
        %v1067 = vld [vmem:[%s1063 + $0xc] sm:$0xf]
        %v1068 = vld [vmem:[%s1063 + $0x10] sm:$0xf]
        %v1069 = vld [vmem:[%s1063 + $0x14] sm:$0xf]
        %v1070 = vld [vmem:[%s1063 + $0x18] sm:$0xf]
        %v1071 = vld [vmem:[%s1063 + $0x1c] sm:$0xf]
        %v1072 = vld [vmem:[%s1063 + $0x20] sm:$0xf]
        %v1073 = vld [vmem:[%s1063 + $0x24] sm:$0xf]
        %v1074 = vld [vmem:[%s1063 + $0x28] sm:$0xf]
        %v1075 = vld [vmem:[%s1063 + $0x2c] sm:$0xf]
        %v1076 = vld [vmem:[%s1063 + $0x30] sm:$0xf]
        %v1077 = vld [vmem:[%s1063 + $0x34] sm:$0xf]
        %v1078 = vld [vmem:[%s1063 + $0x38] sm:$0xf]
        %v1079 = vld [vmem:[%s1063 + $0x3c] sm:$0xf]
        %vm1080 = vsmask.f32 7424
        %v1081 = vrot.slane %v801, 1
        %v1082 = vor.u32 %v798, %v1081
        %v1083 = vrot.slane %v809, 1
        %v1084 = vsel %vm1080, %v1082, %v1083
        %v1085 = vor.u32 %v806, %v1083
        %v1086 = vrot.slane %v817, 1
        %v1087 = vsel %vm1080, %v1085, %v1086
        %v1088 = vor.u32 %v814, %v1086
        %v1089 = vshll.u32 0, 16
        %v1091 = vrot.slane %v1089, 1
        %v1092 = vsel %vm1080, %v1088, %v1091
        %v1112 = vunpack.c.l.b16 %v1064
        %v1113 = vunpack.c.l.b16 %v1065
        %v1114 = vunpack.c.l.b16 %v1066
        %v1115 = vunpack.c.l.b16 %v1067
        %v1116 = vunpack.c.l.b16 %v1068
        %v1117 = vunpack.c.l.b16 %v1069
        %v1118 = vunpack.c.l.b16 %v1070
        %v1119 = vunpack.c.l.b16 %v1071
        %v1120 = vunpack.c.l.b16 %v1072
        %v1121 = vunpack.c.l.b16 %v1073
        %v1122 = vunpack.c.l.b16 %v1074
        %v1123 = vunpack.c.l.b16 %v1075
        %v1124 = vunpack.c.l.b16 %v1076
        %v1125 = vunpack.c.l.b16 %v1077
        %v1126 = vunpack.c.l.b16 %v1078
        %v1127 = vunpack.c.l.b16 %v1079
        %v1128 = vpack.c.b16 %v1113, %v1112
        %v1129 = vpack.c.b16 %v1115, %v1114
        %v1130 = vpack.c.b16 %v1117, %v1116
        %v1131 = vpack.c.b16 %v1119, %v1118
        %v1132 = vpack.c.b16 %v1121, %v1120
        %v1133 = vpack.c.b16 %v1123, %v1122
        %v1134 = vpack.c.b16 %v1125, %v1124
        %v1135 = vpack.c.b16 %v1127, %v1126
        %1144 = vmatprep.subr.bf16.mxu0 0
        %1145 = vmatpush1.bf16.msra.mxu0 %v1128
        %1146 = vmatprep.subr.bf16.mxu0 0
        %1147 = vmatpush1.bf16.msra.mxu0 %v1129
        %1148 = vmatprep.subr.bf16.mxu0 0
        %1149 = vmatpush1.bf16.msra.mxu0 %v1130
        %1150 = vmatprep.subr.bf16.mxu0 0
        %1151 = vmatpush1.bf16.msra.mxu0 %v1131
        %1152 = vmatprep.subr.bf16.mxu0 0
        %1153 = vmatpush1.bf16.msra.mxu0 %v1132
        %1154 = vmatprep.subr.bf16.mxu0 0
        %1155 = vmatpush1.bf16.msra.mxu0 %v1133
        %1156 = vmatprep.subr.bf16.mxu0 0
        %1157 = vmatpush1.bf16.msra.mxu0 %v1134
        %1158 = vmatprep.subr.bf16.mxu0 0
        %1159 = vmatpush1.bf16.msra.mxu0 %v1135
        %1160 = vmatprep.subr.bf16.mxu0 0
        %1161 = vmatpush1.bf16.msra.mxu0 0
        %1162 = vmatprep.subr.bf16.mxu0 0
        %1163 = vmatpush1.bf16.msra.mxu0 0
        %1164 = vmatprep.subr.bf16.mxu0 0
        %1165 = vmatpush1.bf16.msra.mxu0 0
        %1166 = vmatprep.subr.bf16.mxu0 0
        %1167 = vmatpush1.bf16.msra.mxu0 0
        %1168 = vmatprep.subr.bf16.mxu0 0
        %1169 = vmatpush1.bf16.msra.mxu0 0
        %1170 = vmatprep.subr.bf16.mxu0 0
        %1171 = vmatpush1.bf16.msra.mxu0 0
        %1172 = vmatprep.subr.bf16.mxu0 0
        %1173 = vmatpush1.bf16.msra.mxu0 0
        %1174 = vmatprep.subr.bf16.mxu0 0
        %1175 = vmatpush1.bf16.msra.mxu0 0
        %1176 = vmatprep.mubr.bf16.mxu0 0
        %1177 = vmatmul.mubr.bf16.gmra.mrb[0].mxu0 %v1084
        %v1178 = vpop.f32.mrb[0].mxu0
        %v1179 = vadd.f32 0.0, %v1178
        %v1180 = vpop.f32.mrb[0].mxu0
        %v1181 = vpop.f32.mrb[0].mxu0
        %v1182 = vadd.f32 0.0, %v1181
        %v1183 = vpop.f32.mrb[0].mxu0
        %1184 = vmatprep.mubr.bf16.mxu0 0
        %1185 = vmatmul.mubr.bf16.gmra.mrb[0].mxu0 %v1087
        %v1186 = vpop.f32.mrb[0].mxu0
        %v1187 = vadd.f32 0.0, %v1186
        %v1188 = vpop.f32.mrb[0].mxu0
        %v1189 = vpop.f32.mrb[0].mxu0
        %v1190 = vadd.f32 0.0, %v1189
        %v1191 = vpop.f32.mrb[0].mxu0
        %1192 = vmatprep.mubr.bf16.mxu0 0
        %1193 = vmatmul.mubr.bf16.gmra.mrb[0].mxu0 %v1092
        %v1194 = vpop.f32.mrb[0].mxu0
        %v1195 = vadd.f32 0.0, %v1194
        %v1196 = vpop.f32.mrb[0].mxu0
        %v1197 = vpop.f32.mrb[0].mxu0
        %v1198 = vadd.f32 0.0, %v1197
        %v1199 = vpop.f32.mrb[0].mxu0
        %1200 = vdwg.mxu0
        %v1201 = vadd.f32 %v1057, %v1179
        %v1202 = vadd.f32 %v1058, %v1182
        %v1203 = vadd.f32 %v1059, %v1187
        %v1204 = vadd.f32 %v1060, %v1190
        %v1205 = vadd.f32 %v1061, %v1195
        %v1206 = vadd.f32 %v1062, %v1198
        %s1207 = scalar_lea.vmem [#allocation8], 256
        %v1208 = vld [vmem:[%s1207] sm:$0xf]
        %v1209 = vld [vmem:[%s1207 + $0x4] sm:$0xf]
        %v1210 = vld [vmem:[%s1207 + $0x8] sm:$0xf]
        %v1211 = vld [vmem:[%s1207 + $0xc] sm:$0xf]
        %v1212 = vld [vmem:[%s1207 + $0x10] sm:$0xf]
        %v1213 = vld [vmem:[%s1207 + $0x14] sm:$0xf]
        %v1214 = vld [vmem:[%s1207 + $0x18] sm:$0xf]
        %v1215 = vld [vmem:[%s1207 + $0x1c] sm:$0xf]
        %v1216 = vld [vmem:[%s1207 + $0x20] sm:$0xf]
        %v1217 = vld [vmem:[%s1207 + $0x24] sm:$0xf]
        %v1218 = vld [vmem:[%s1207 + $0x28] sm:$0xf]
        %v1219 = vld [vmem:[%s1207 + $0x2c] sm:$0xf]
        %v1220 = vld [vmem:[%s1207 + $0x30] sm:$0xf]
        %v1221 = vld [vmem:[%s1207 + $0x34] sm:$0xf]
        %v1222 = vld [vmem:[%s1207 + $0x38] sm:$0xf]
        %v1223 = vld [vmem:[%s1207 + $0x3c] sm:$0xf]
        %vm1224 = vcmask 1046528
        %v1225 = vrot.slane %v623, 1
        %v1226 = vrot.slane %v624, 1
        %v1227 = vsel %vm1224, %v1225, %v1226
        %v1228 = vrot.slane %v625, 1
        %v1229 = vsel %vm1224, %v1226, %v1228
        %v1230 = vrot.slane 0, 1
        %v1231 = vsel %vm1224, %v1228, %v1230
        %v1251 = vunpack.c.l.b16 %v1208
        %v1252 = vunpack.c.l.b16 %v1209
        %v1253 = vunpack.c.l.b16 %v1210
        %v1254 = vunpack.c.l.b16 %v1211
        %v1255 = vunpack.c.l.b16 %v1212
        %v1256 = vunpack.c.l.b16 %v1213
        %v1257 = vunpack.c.l.b16 %v1214
        %v1258 = vunpack.c.l.b16 %v1215
        %v1259 = vunpack.c.l.b16 %v1216
        %v1260 = vunpack.c.l.b16 %v1217
        %v1261 = vunpack.c.l.b16 %v1218
        %v1262 = vunpack.c.l.b16 %v1219
        %v1263 = vunpack.c.l.b16 %v1220
        %v1264 = vunpack.c.l.b16 %v1221
        %v1265 = vunpack.c.l.b16 %v1222
        %v1266 = vunpack.c.l.b16 %v1223
        %v1267 = vpack.c.b16 %v1252, %v1251
        %v1268 = vpack.c.b16 %v1254, %v1253
        %v1269 = vpack.c.b16 %v1256, %v1255
        %v1270 = vpack.c.b16 %v1258, %v1257
        %v1271 = vpack.c.b16 %v1260, %v1259
        %v1272 = vpack.c.b16 %v1262, %v1261
        %v1273 = vpack.c.b16 %v1264, %v1263
        %v1274 = vpack.c.b16 %v1266, %v1265
        %1283 = vmatprep.subr.bf16.mxu0 0
        %1284 = vmatpush1.bf16.msra.mxu0 %v1267
        %1285 = vmatprep.subr.bf16.mxu0 0
        %1286 = vmatpush1.bf16.msra.mxu0 %v1268
        %1287 = vmatprep.subr.bf16.mxu0 0
        %1288 = vmatpush1.bf16.msra.mxu0 %v1269
        %1289 = vmatprep.subr.bf16.mxu0 0
        %1290 = vmatpush1.bf16.msra.mxu0 %v1270
        %1291 = vmatprep.subr.bf16.mxu0 0
        %1292 = vmatpush1.bf16.msra.mxu0 %v1271
        %1293 = vmatprep.subr.bf16.mxu0 0
        %1294 = vmatpush1.bf16.msra.mxu0 %v1272
        %1295 = vmatprep.subr.bf16.mxu0 0
        %1296 = vmatpush1.bf16.msra.mxu0 %v1273
        %1297 = vmatprep.subr.bf16.mxu0 0
        %1298 = vmatpush1.bf16.msra.mxu0 %v1274
        %1299 = vmatprep.subr.bf16.mxu0 0
        %1300 = vmatpush1.bf16.msra.mxu0 0
        %1301 = vmatprep.subr.bf16.mxu0 0
        %1302 = vmatpush1.bf16.msra.mxu0 0
        %1303 = vmatprep.subr.bf16.mxu0 0
        %1304 = vmatpush1.bf16.msra.mxu0 0
        %1305 = vmatprep.subr.bf16.mxu0 0
        %1306 = vmatpush1.bf16.msra.mxu0 0
        %1307 = vmatprep.subr.bf16.mxu0 0
        %1308 = vmatpush1.bf16.msra.mxu0 0
        %1309 = vmatprep.subr.bf16.mxu0 0
        %1310 = vmatpush1.bf16.msra.mxu0 0
        %1311 = vmatprep.subr.bf16.mxu0 0
        %1312 = vmatpush1.bf16.msra.mxu0 0
        %1313 = vmatprep.subr.bf16.mxu0 0
        %1314 = vmatpush1.bf16.msra.mxu0 0
        %1315 = vmatprep.mubr.bf16.mxu0 0
        %1316 = vmatmul.mubr.bf16.gmra.mrb[0].mxu0 %v1227
        %v1317 = vpop.f32.mrb[0].mxu0
        %v1318 = vadd.f32 0.0, %v1317
        %v1319 = vpop.f32.mrb[0].mxu0
        %v1320 = vpop.f32.mrb[0].mxu0
        %v1321 = vadd.f32 0.0, %v1320
        %v1322 = vpop.f32.mrb[0].mxu0
        %1323 = vmatprep.mubr.bf16.mxu0 0
        %1324 = vmatmul.mubr.bf16.gmra.mrb[0].mxu0 %v1229
        %v1325 = vpop.f32.mrb[0].mxu0
        %v1326 = vadd.f32 0.0, %v1325
        %v1327 = vpop.f32.mrb[0].mxu0
        %v1328 = vpop.f32.mrb[0].mxu0
        %v1329 = vadd.f32 0.0, %v1328
        %v1330 = vpop.f32.mrb[0].mxu0
        %1331 = vmatprep.mubr.bf16.mxu0 0
        %1332 = vmatmul.mubr.bf16.gmra.mrb[0].mxu0 %v1231
        %v1333 = vpop.f32.mrb[0].mxu0
        %v1334 = vadd.f32 0.0, %v1333
        %v1335 = vpop.f32.mrb[0].mxu0
        %v1336 = vpop.f32.mrb[0].mxu0
        %v1337 = vadd.f32 0.0, %v1336
        %v1338 = vpop.f32.mrb[0].mxu0
        %1339 = vdwg.mxu0
        %v1340 = vadd.f32 %v1201, %v1318
        %v1341 = vadd.f32 %v1202, %v1321
        %v1342 = vadd.f32 %v1203, %v1326
        %v1343 = vadd.f32 %v1204, %v1329
        %v1344 = vadd.f32 %v1205, %v1334
        %v1345 = vadd.f32 %v1206, %v1337
        %v1346 = vtanh.pop %v1340
        %v1347 = vtanh.pop %v1341
        %v1348 = vtanh.pop %v1342
        %v1349 = vtanh.pop %v1343
        %v1350 = vtanh.pop %v1344
        %v1351 = vtanh.pop %v1345
        %v1352 = vsel %vm593, %v1346, 0.0
        %v1353 = vsel %vm594, %v1347, 0.0
        %v1354 = vsel %vm595, %v1348, 0.0
        %v1355 = vsel %vm596, %v1349, 0.0
        %v1356 = vsel %vm597, %v1350, 0.0
        %v1357 = vsel %vm598, %v1351, 0.0
        %v1358 = vpack.c.bf16 %v1353, %v1352
        %v1359 = vpack.c.bf16 %v1355, %v1354
        %v1360 = vpack.c.bf16 %v1357, %v1356
        %v1361 = vld [vmem:[%s7] sm:$0x1]
        %v1363 = vlaneseq
        %v1364 = vshrl.u32 %v1363, 7
        %v1365 = vsub.s32 0, %v1364
        %v1366 = vrot.slane %v1361, %v1365
        %v1368 = vld [vmem:[#allocation10] sm:$0xf]
        %v1369 = vld [vmem:[#allocation10 + $0x4] sm:$0xf]
        %v1370 = vld [vmem:[#allocation10 + $0x8] sm:$0xf]
        %v1371 = vld [vmem:[#allocation10 + $0xc] sm:$0xf]
        %v1372 = vld [vmem:[#allocation10 + $0x10] sm:$0xf]
        %v1373 = vld [vmem:[#allocation10 + $0x14] sm:$0xf]
        %v1374 = vld [vmem:[#allocation10 + $0x18] sm:$0xf]
        %v1375 = vld [vmem:[#allocation10 + $0x1c] sm:$0xf]
        %v1376 = vld [vmem:[#allocation10 + $0x20] sm:$0xf]
        %v1377 = vld [vmem:[#allocation10 + $0x24] sm:$0xf]
        %v1378 = vld [vmem:[#allocation10 + $0x28] sm:$0xf]
        %v1379 = vld [vmem:[#allocation10 + $0x2c] sm:$0xf]
        %v1380 = vld [vmem:[#allocation10 + $0x30] sm:$0xf]
        %v1381 = vld [vmem:[#allocation10 + $0x34] sm:$0xf]
        %v1382 = vld [vmem:[#allocation10 + $0x38] sm:$0xf]
        %v1383 = vld [vmem:[#allocation10 + $0x3c] sm:$0xf]
        %v1387 = vrot.slane %v1358, 7
        %v1388 = vsel %vm653, %v654, %v1387
        %v1389 = vrot.slane %v1359, 7
        %v1390 = vsel %vm653, %v1387, %v1389
        %v1391 = vrot.slane %v1360, 7
        %v1392 = vsel %vm653, %v1389, %v1391
        %v1412 = vunpack.c.l.b16 %v1368
        %v1413 = vunpack.c.l.b16 %v1369
        %v1414 = vunpack.c.l.b16 %v1370
        %v1415 = vunpack.c.l.b16 %v1371
        %v1416 = vunpack.c.l.b16 %v1372
        %v1417 = vunpack.c.l.b16 %v1373
        %v1418 = vunpack.c.l.b16 %v1374
        %v1419 = vunpack.c.l.b16 %v1375
        %v1420 = vunpack.c.l.b16 %v1376
        %v1421 = vunpack.c.l.b16 %v1377
        %v1422 = vunpack.c.l.b16 %v1378
        %v1423 = vunpack.c.l.b16 %v1379
        %v1424 = vunpack.c.l.b16 %v1380
        %v1425 = vunpack.c.l.b16 %v1381
        %v1426 = vunpack.c.l.b16 %v1382
        %v1427 = vunpack.c.l.b16 %v1383
        %v1428 = vpack.c.b16 %v1413, %v1412
        %v1429 = vpack.c.b16 %v1415, %v1414
        %v1430 = vpack.c.b16 %v1417, %v1416
        %v1431 = vpack.c.b16 %v1419, %v1418
        %v1432 = vpack.c.b16 %v1421, %v1420
        %v1433 = vpack.c.b16 %v1423, %v1422
        %v1434 = vpack.c.b16 %v1425, %v1424
        %v1435 = vpack.c.b16 %v1427, %v1426
        %1444 = vmatprep.subr.bf16.mxu0 0
        %1445 = vmatpush1.bf16.msra.mxu0 %v1428
        %1446 = vmatprep.subr.bf16.mxu0 0
        %1447 = vmatpush1.bf16.msra.mxu0 %v1429
        %1448 = vmatprep.subr.bf16.mxu0 0
        %1449 = vmatpush1.bf16.msra.mxu0 %v1430
        %1450 = vmatprep.subr.bf16.mxu0 0
        %1451 = vmatpush1.bf16.msra.mxu0 %v1431
        %1452 = vmatprep.subr.bf16.mxu0 0
        %1453 = vmatpush1.bf16.msra.mxu0 %v1432
        %1454 = vmatprep.subr.bf16.mxu0 0
        %1455 = vmatpush1.bf16.msra.mxu0 %v1433
        %1456 = vmatprep.subr.bf16.mxu0 0
        %1457 = vmatpush1.bf16.msra.mxu0 %v1434
        %1458 = vmatprep.subr.bf16.mxu0 0
        %1459 = vmatpush1.bf16.msra.mxu0 %v1435
        %1460 = vmatprep.subr.bf16.mxu0 0
        %1461 = vmatpush1.bf16.msra.mxu0 0
        %1462 = vmatprep.subr.bf16.mxu0 0
        %1463 = vmatpush1.bf16.msra.mxu0 0
        %1464 = vmatprep.subr.bf16.mxu0 0
        %1465 = vmatpush1.bf16.msra.mxu0 0
        %1466 = vmatprep.subr.bf16.mxu0 0
        %1467 = vmatpush1.bf16.msra.mxu0 0
        %1468 = vmatprep.subr.bf16.mxu0 0
        %1469 = vmatpush1.bf16.msra.mxu0 0
        %1470 = vmatprep.subr.bf16.mxu0 0
        %1471 = vmatpush1.bf16.msra.mxu0 0
        %1472 = vmatprep.subr.bf16.mxu0 0
        %1473 = vmatpush1.bf16.msra.mxu0 0
        %1474 = vmatprep.subr.bf16.mxu0 0
        %1475 = vmatpush1.bf16.msra.mxu0 0
        %1476 = vmatprep.mubr.bf16.mxu0 0
        %1477 = vmatmul.mubr.bf16.gmra.mrb[0].mxu0 %v1388
        %v1478 = vpop.f32.mrb[0].mxu0
        %v1479 = vadd.f32 0.0, %v1478
        %v1480 = vpop.f32.mrb[0].mxu0
        %v1481 = vpop.f32.mrb[0].mxu0
        %v1482 = vadd.f32 0.0, %v1481
        %v1483 = vpop.f32.mrb[0].mxu0
        %1484 = vmatprep.mubr.bf16.mxu0 0
        %1485 = vmatmul.mubr.bf16.gmra.mrb[0].mxu0 %v1390
        %v1486 = vpop.f32.mrb[0].mxu0
        %v1487 = vadd.f32 0.0, %v1486
        %v1488 = vpop.f32.mrb[0].mxu0
        %v1489 = vpop.f32.mrb[0].mxu0
        %v1490 = vadd.f32 0.0, %v1489
        %v1491 = vpop.f32.mrb[0].mxu0
        %1492 = vmatprep.mubr.bf16.mxu0 0
        %1493 = vmatmul.mubr.bf16.gmra.mrb[0].mxu0 %v1392
        %v1494 = vpop.f32.mrb[0].mxu0
        %v1495 = vadd.f32 0.0, %v1494
        %v1496 = vpop.f32.mrb[0].mxu0
        %v1497 = vpop.f32.mrb[0].mxu0
        %v1498 = vadd.f32 0.0, %v1497
        %v1499 = vpop.f32.mrb[0].mxu0
        %1500 = vdwg.mxu0
        %v1501 = vadd.f32 %v1366, %v1479
        %v1502 = vadd.f32 %v1366, %v1482
        %v1503 = vadd.f32 %v1366, %v1487
        %v1504 = vadd.f32 %v1366, %v1490
        %v1505 = vadd.f32 %v1366, %v1495
        %v1506 = vadd.f32 %v1366, %v1498
        %s1507 = scalar_lea.vmem [#allocation10], 64
        %v1508 = vld [vmem:[%s1507] sm:$0xf]
        %v1509 = vld [vmem:[%s1507 + $0x4] sm:$0xf]
        %v1510 = vld [vmem:[%s1507 + $0x8] sm:$0xf]
        %v1511 = vld [vmem:[%s1507 + $0xc] sm:$0xf]
        %v1512 = vld [vmem:[%s1507 + $0x10] sm:$0xf]
        %v1513 = vld [vmem:[%s1507 + $0x14] sm:$0xf]
        %v1514 = vld [vmem:[%s1507 + $0x18] sm:$0xf]
        %v1515 = vld [vmem:[%s1507 + $0x1c] sm:$0xf]
        %v1516 = vld [vmem:[%s1507 + $0x20] sm:$0xf]
        %v1517 = vld [vmem:[%s1507 + $0x24] sm:$0xf]
        %v1518 = vld [vmem:[%s1507 + $0x28] sm:$0xf]
        %v1519 = vld [vmem:[%s1507 + $0x2c] sm:$0xf]
        %v1520 = vld [vmem:[%s1507 + $0x30] sm:$0xf]
        %v1521 = vld [vmem:[%s1507 + $0x34] sm:$0xf]
        %v1522 = vld [vmem:[%s1507 + $0x38] sm:$0xf]
        %v1523 = vld [vmem:[%s1507 + $0x3c] sm:$0xf]
        %v1525 = vshrl.u32 %v1358, 16
        %v1527 = vrot.slane %v1525, 7
        %v1528 = vshll.u32 %v1358, 16
        %v1530 = vor.u32 %v1527, %v1528
        %v1531 = vsel %vm792, %v796, %v1530
        %v1533 = vshrl.u32 %v1359, 16
        %v1535 = vrot.slane %v1533, 7
        %v1536 = vshll.u32 %v1359, 16
        %v1538 = vor.u32 %v1535, %v1536
        %v1539 = vsel %vm792, %v1527, %v1538
        %v1541 = vshrl.u32 %v1360, 16
        %v1543 = vrot.slane %v1541, 7
        %v1544 = vshll.u32 %v1360, 16
        %v1546 = vor.u32 %v1543, %v1544
        %v1547 = vsel %vm792, %v1535, %v1546
        %v1567 = vunpack.c.l.b16 %v1508
        %v1568 = vunpack.c.l.b16 %v1509
        %v1569 = vunpack.c.l.b16 %v1510
        %v1570 = vunpack.c.l.b16 %v1511
        %v1571 = vunpack.c.l.b16 %v1512
        %v1572 = vunpack.c.l.b16 %v1513
        %v1573 = vunpack.c.l.b16 %v1514
        %v1574 = vunpack.c.l.b16 %v1515
        %v1575 = vunpack.c.l.b16 %v1516
        %v1576 = vunpack.c.l.b16 %v1517
        %v1577 = vunpack.c.l.b16 %v1518
        %v1578 = vunpack.c.l.b16 %v1519
        %v1579 = vunpack.c.l.b16 %v1520
        %v1580 = vunpack.c.l.b16 %v1521
        %v1581 = vunpack.c.l.b16 %v1522
        %v1582 = vunpack.c.l.b16 %v1523
        %v1583 = vpack.c.b16 %v1568, %v1567
        %v1584 = vpack.c.b16 %v1570, %v1569
        %v1585 = vpack.c.b16 %v1572, %v1571
        %v1586 = vpack.c.b16 %v1574, %v1573
        %v1587 = vpack.c.b16 %v1576, %v1575
        %v1588 = vpack.c.b16 %v1578, %v1577
        %v1589 = vpack.c.b16 %v1580, %v1579
        %v1590 = vpack.c.b16 %v1582, %v1581
        %1599 = vmatprep.subr.bf16.mxu0 0
        %1600 = vmatpush1.bf16.msra.mxu0 %v1583
        %1601 = vmatprep.subr.bf16.mxu0 0
        %1602 = vmatpush1.bf16.msra.mxu0 %v1584
        %1603 = vmatprep.subr.bf16.mxu0 0
        %1604 = vmatpush1.bf16.msra.mxu0 %v1585
        %1605 = vmatprep.subr.bf16.mxu0 0
        %1606 = vmatpush1.bf16.msra.mxu0 %v1586
        %1607 = vmatprep.subr.bf16.mxu0 0
        %1608 = vmatpush1.bf16.msra.mxu0 %v1587
        %1609 = vmatprep.subr.bf16.mxu0 0
        %1610 = vmatpush1.bf16.msra.mxu0 %v1588
        %1611 = vmatprep.subr.bf16.mxu0 0
        %1612 = vmatpush1.bf16.msra.mxu0 %v1589
        %1613 = vmatprep.subr.bf16.mxu0 0
        %1614 = vmatpush1.bf16.msra.mxu0 %v1590
        %1615 = vmatprep.subr.bf16.mxu0 0
        %1616 = vmatpush1.bf16.msra.mxu0 0
        %1617 = vmatprep.subr.bf16.mxu0 0
        %1618 = vmatpush1.bf16.msra.mxu0 0
        %1619 = vmatprep.subr.bf16.mxu0 0
        %1620 = vmatpush1.bf16.msra.mxu0 0
        %1621 = vmatprep.subr.bf16.mxu0 0
        %1622 = vmatpush1.bf16.msra.mxu0 0
        %1623 = vmatprep.subr.bf16.mxu0 0
        %1624 = vmatpush1.bf16.msra.mxu0 0
        %1625 = vmatprep.subr.bf16.mxu0 0
        %1626 = vmatpush1.bf16.msra.mxu0 0
        %1627 = vmatprep.subr.bf16.mxu0 0
        %1628 = vmatpush1.bf16.msra.mxu0 0
        %1629 = vmatprep.subr.bf16.mxu0 0
        %1630 = vmatpush1.bf16.msra.mxu0 0
        %1631 = vmatprep.mubr.bf16.mxu0 0
        %1632 = vmatmul.mubr.bf16.gmra.mrb[0].mxu0 %v1531
        %v1633 = vpop.f32.mrb[0].mxu0
        %v1634 = vadd.f32 0.0, %v1633
        %v1635 = vpop.f32.mrb[0].mxu0
        %v1636 = vpop.f32.mrb[0].mxu0
        %v1637 = vadd.f32 0.0, %v1636
        %v1638 = vpop.f32.mrb[0].mxu0
        %1639 = vmatprep.mubr.bf16.mxu0 0
        %1640 = vmatmul.mubr.bf16.gmra.mrb[0].mxu0 %v1539
        %v1641 = vpop.f32.mrb[0].mxu0
        %v1642 = vadd.f32 0.0, %v1641
        %v1643 = vpop.f32.mrb[0].mxu0
        %v1644 = vpop.f32.mrb[0].mxu0
        %v1645 = vadd.f32 0.0, %v1644
        %v1646 = vpop.f32.mrb[0].mxu0
        %1647 = vmatprep.mubr.bf16.mxu0 0
        %1648 = vmatmul.mubr.bf16.gmra.mrb[0].mxu0 %v1547
        %v1649 = vpop.f32.mrb[0].mxu0
        %v1650 = vadd.f32 0.0, %v1649
        %v1651 = vpop.f32.mrb[0].mxu0
        %v1652 = vpop.f32.mrb[0].mxu0
        %v1653 = vadd.f32 0.0, %v1652
        %v1654 = vpop.f32.mrb[0].mxu0
        %1655 = vdwg.mxu0
        %v1656 = vadd.f32 %v1501, %v1634
        %v1657 = vadd.f32 %v1502, %v1637
        %v1658 = vadd.f32 %v1503, %v1642
        %v1659 = vadd.f32 %v1504, %v1645
        %v1660 = vadd.f32 %v1505, %v1650
        %v1661 = vadd.f32 %v1506, %v1653
        %s1662 = scalar_lea.vmem [#allocation10], 128
        %v1663 = vld [vmem:[%s1662] sm:$0xf]
        %v1664 = vld [vmem:[%s1662 + $0x4] sm:$0xf]
        %v1665 = vld [vmem:[%s1662 + $0x8] sm:$0xf]
        %v1666 = vld [vmem:[%s1662 + $0xc] sm:$0xf]
        %v1667 = vld [vmem:[%s1662 + $0x10] sm:$0xf]
        %v1668 = vld [vmem:[%s1662 + $0x14] sm:$0xf]
        %v1669 = vld [vmem:[%s1662 + $0x18] sm:$0xf]
        %v1670 = vld [vmem:[%s1662 + $0x1c] sm:$0xf]
        %v1671 = vld [vmem:[%s1662 + $0x20] sm:$0xf]
        %v1672 = vld [vmem:[%s1662 + $0x24] sm:$0xf]
        %v1673 = vld [vmem:[%s1662 + $0x28] sm:$0xf]
        %v1674 = vld [vmem:[%s1662 + $0x2c] sm:$0xf]
        %v1675 = vld [vmem:[%s1662 + $0x30] sm:$0xf]
        %v1676 = vld [vmem:[%s1662 + $0x34] sm:$0xf]
        %v1677 = vld [vmem:[%s1662 + $0x38] sm:$0xf]
        %v1678 = vld [vmem:[%s1662 + $0x3c] sm:$0xf]
        %v1695 = vunpack.c.l.b16 %v1663
        %v1696 = vunpack.c.l.b16 %v1664
        %v1697 = vunpack.c.l.b16 %v1665
        %v1698 = vunpack.c.l.b16 %v1666
        %v1699 = vunpack.c.l.b16 %v1667
        %v1700 = vunpack.c.l.b16 %v1668
        %v1701 = vunpack.c.l.b16 %v1669
        %v1702 = vunpack.c.l.b16 %v1670
        %v1703 = vunpack.c.l.b16 %v1671
        %v1704 = vunpack.c.l.b16 %v1672
        %v1705 = vunpack.c.l.b16 %v1673
        %v1706 = vunpack.c.l.b16 %v1674
        %v1707 = vunpack.c.l.b16 %v1675
        %v1708 = vunpack.c.l.b16 %v1676
        %v1709 = vunpack.c.l.b16 %v1677
        %v1710 = vunpack.c.l.b16 %v1678
        %v1711 = vpack.c.b16 %v1696, %v1695
        %v1712 = vpack.c.b16 %v1698, %v1697
        %v1713 = vpack.c.b16 %v1700, %v1699
        %v1714 = vpack.c.b16 %v1702, %v1701
        %v1715 = vpack.c.b16 %v1704, %v1703
        %v1716 = vpack.c.b16 %v1706, %v1705
        %v1717 = vpack.c.b16 %v1708, %v1707
        %v1718 = vpack.c.b16 %v1710, %v1709
        %1727 = vmatprep.subr.bf16.mxu0 0
        %1728 = vmatpush1.bf16.msra.mxu0 %v1711
        %1729 = vmatprep.subr.bf16.mxu0 0
        %1730 = vmatpush1.bf16.msra.mxu0 %v1712
        %1731 = vmatprep.subr.bf16.mxu0 0
        %1732 = vmatpush1.bf16.msra.mxu0 %v1713
        %1733 = vmatprep.subr.bf16.mxu0 0
        %1734 = vmatpush1.bf16.msra.mxu0 %v1714
        %1735 = vmatprep.subr.bf16.mxu0 0
        %1736 = vmatpush1.bf16.msra.mxu0 %v1715
        %1737 = vmatprep.subr.bf16.mxu0 0
        %1738 = vmatpush1.bf16.msra.mxu0 %v1716
        %1739 = vmatprep.subr.bf16.mxu0 0
        %1740 = vmatpush1.bf16.msra.mxu0 %v1717
        %1741 = vmatprep.subr.bf16.mxu0 0
        %1742 = vmatpush1.bf16.msra.mxu0 %v1718
        %1743 = vmatprep.subr.bf16.mxu0 0
        %1744 = vmatpush1.bf16.msra.mxu0 0
        %1745 = vmatprep.subr.bf16.mxu0 0
        %1746 = vmatpush1.bf16.msra.mxu0 0
        %1747 = vmatprep.subr.bf16.mxu0 0
        %1748 = vmatpush1.bf16.msra.mxu0 0
        %1749 = vmatprep.subr.bf16.mxu0 0
        %1750 = vmatpush1.bf16.msra.mxu0 0
        %1751 = vmatprep.subr.bf16.mxu0 0
        %1752 = vmatpush1.bf16.msra.mxu0 0
        %1753 = vmatprep.subr.bf16.mxu0 0
        %1754 = vmatpush1.bf16.msra.mxu0 0
        %1755 = vmatprep.subr.bf16.mxu0 0
        %1756 = vmatpush1.bf16.msra.mxu0 0
        %1757 = vmatprep.subr.bf16.mxu0 0
        %1758 = vmatpush1.bf16.msra.mxu0 0
        %1759 = vmatprep.mubr.bf16.mxu0 0
        %1760 = vmatmul.mubr.bf16.gmra.mrb[0].mxu0 %v1358
        %v1761 = vpop.f32.mrb[0].mxu0
        %v1762 = vadd.f32 0.0, %v1761
        %v1763 = vpop.f32.mrb[0].mxu0
        %v1764 = vpop.f32.mrb[0].mxu0
        %v1765 = vadd.f32 0.0, %v1764
        %v1766 = vpop.f32.mrb[0].mxu0
        %1767 = vmatprep.mubr.bf16.mxu0 0
        %1768 = vmatmul.mubr.bf16.gmra.mrb[0].mxu0 %v1359
        %v1769 = vpop.f32.mrb[0].mxu0
        %v1770 = vadd.f32 0.0, %v1769
        %v1771 = vpop.f32.mrb[0].mxu0
        %v1772 = vpop.f32.mrb[0].mxu0
        %v1773 = vadd.f32 0.0, %v1772
        %v1774 = vpop.f32.mrb[0].mxu0
        %1775 = vmatprep.mubr.bf16.mxu0 0
        %1776 = vmatmul.mubr.bf16.gmra.mrb[0].mxu0 %v1360
        %v1777 = vpop.f32.mrb[0].mxu0
        %v1778 = vadd.f32 0.0, %v1777
        %v1779 = vpop.f32.mrb[0].mxu0
        %v1780 = vpop.f32.mrb[0].mxu0
        %v1781 = vadd.f32 0.0, %v1780
        %v1782 = vpop.f32.mrb[0].mxu0
        %1783 = vdwg.mxu0
        %v1784 = vadd.f32 %v1656, %v1762
        %v1785 = vadd.f32 %v1657, %v1765
        %v1786 = vadd.f32 %v1658, %v1770
        %v1787 = vadd.f32 %v1659, %v1773
        %v1788 = vadd.f32 %v1660, %v1778
        %v1789 = vadd.f32 %v1661, %v1781
        %s1790 = scalar_lea.vmem [#allocation10], 192
        %v1791 = vld [vmem:[%s1790] sm:$0xf]
        %v1792 = vld [vmem:[%s1790 + $0x4] sm:$0xf]
        %v1793 = vld [vmem:[%s1790 + $0x8] sm:$0xf]
        %v1794 = vld [vmem:[%s1790 + $0xc] sm:$0xf]
        %v1795 = vld [vmem:[%s1790 + $0x10] sm:$0xf]
        %v1796 = vld [vmem:[%s1790 + $0x14] sm:$0xf]
        %v1797 = vld [vmem:[%s1790 + $0x18] sm:$0xf]
        %v1798 = vld [vmem:[%s1790 + $0x1c] sm:$0xf]
        %v1799 = vld [vmem:[%s1790 + $0x20] sm:$0xf]
        %v1800 = vld [vmem:[%s1790 + $0x24] sm:$0xf]
        %v1801 = vld [vmem:[%s1790 + $0x28] sm:$0xf]
        %v1802 = vld [vmem:[%s1790 + $0x2c] sm:$0xf]
        %v1803 = vld [vmem:[%s1790 + $0x30] sm:$0xf]
        %v1804 = vld [vmem:[%s1790 + $0x34] sm:$0xf]
        %v1805 = vld [vmem:[%s1790 + $0x38] sm:$0xf]
        %v1806 = vld [vmem:[%s1790 + $0x3c] sm:$0xf]
        %v1807 = vrot.slane %v1528, 1
        %v1808 = vor.u32 %v1525, %v1807
        %v1809 = vrot.slane %v1536, 1
        %v1810 = vsel %vm1080, %v1808, %v1809
        %v1811 = vor.u32 %v1533, %v1809
        %v1812 = vrot.slane %v1544, 1
        %v1813 = vsel %vm1080, %v1811, %v1812
        %v1814 = vor.u32 %v1541, %v1812
        %v1815 = vsel %vm1080, %v1814, %v1091
        %v1835 = vunpack.c.l.b16 %v1791
        %v1836 = vunpack.c.l.b16 %v1792
        %v1837 = vunpack.c.l.b16 %v1793
        %v1838 = vunpack.c.l.b16 %v1794
        %v1839 = vunpack.c.l.b16 %v1795
        %v1840 = vunpack.c.l.b16 %v1796
        %v1841 = vunpack.c.l.b16 %v1797
        %v1842 = vunpack.c.l.b16 %v1798
        %v1843 = vunpack.c.l.b16 %v1799
        %v1844 = vunpack.c.l.b16 %v1800
        %v1845 = vunpack.c.l.b16 %v1801
        %v1846 = vunpack.c.l.b16 %v1802
        %v1847 = vunpack.c.l.b16 %v1803
        %v1848 = vunpack.c.l.b16 %v1804
        %v1849 = vunpack.c.l.b16 %v1805
        %v1850 = vunpack.c.l.b16 %v1806
        %v1851 = vpack.c.b16 %v1836, %v1835
        %v1852 = vpack.c.b16 %v1838, %v1837
        %v1853 = vpack.c.b16 %v1840, %v1839
        %v1854 = vpack.c.b16 %v1842, %v1841
        %v1855 = vpack.c.b16 %v1844, %v1843
        %v1856 = vpack.c.b16 %v1846, %v1845
        %v1857 = vpack.c.b16 %v1848, %v1847
        %v1858 = vpack.c.b16 %v1850, %v1849
        %1867 = vmatprep.subr.bf16.mxu0 0
        %1868 = vmatpush1.bf16.msra.mxu0 %v1851
        %1869 = vmatprep.subr.bf16.mxu0 0
        %1870 = vmatpush1.bf16.msra.mxu0 %v1852
        %1871 = vmatprep.subr.bf16.mxu0 0
        %1872 = vmatpush1.bf16.msra.mxu0 %v1853
        %1873 = vmatprep.subr.bf16.mxu0 0
        %1874 = vmatpush1.bf16.msra.mxu0 %v1854
        %1875 = vmatprep.subr.bf16.mxu0 0
        %1876 = vmatpush1.bf16.msra.mxu0 %v1855
        %1877 = vmatprep.subr.bf16.mxu0 0
        %1878 = vmatpush1.bf16.msra.mxu0 %v1856
        %1879 = vmatprep.subr.bf16.mxu0 0
        %1880 = vmatpush1.bf16.msra.mxu0 %v1857
        %1881 = vmatprep.subr.bf16.mxu0 0
        %1882 = vmatpush1.bf16.msra.mxu0 %v1858
        %1883 = vmatprep.subr.bf16.mxu0 0
        %1884 = vmatpush1.bf16.msra.mxu0 0
        %1885 = vmatprep.subr.bf16.mxu0 0
        %1886 = vmatpush1.bf16.msra.mxu0 0
        %1887 = vmatprep.subr.bf16.mxu0 0
        %1888 = vmatpush1.bf16.msra.mxu0 0
        %1889 = vmatprep.subr.bf16.mxu0 0
        %1890 = vmatpush1.bf16.msra.mxu0 0
        %1891 = vmatprep.subr.bf16.mxu0 0
        %1892 = vmatpush1.bf16.msra.mxu0 0
        %1893 = vmatprep.subr.bf16.mxu0 0
        %1894 = vmatpush1.bf16.msra.mxu0 0
        %1895 = vmatprep.subr.bf16.mxu0 0
        %1896 = vmatpush1.bf16.msra.mxu0 0
        %1897 = vmatprep.subr.bf16.mxu0 0
        %1898 = vmatpush1.bf16.msra.mxu0 0
        %1899 = vmatprep.mubr.bf16.mxu0 0
        %1900 = vmatmul.mubr.bf16.gmra.mrb[0].mxu0 %v1810
        %v1901 = vpop.f32.mrb[0].mxu0
        %v1902 = vadd.f32 0.0, %v1901
        %v1903 = vpop.f32.mrb[0].mxu0
        %v1904 = vpop.f32.mrb[0].mxu0
        %v1905 = vadd.f32 0.0, %v1904
        %v1906 = vpop.f32.mrb[0].mxu0
        %1907 = vmatprep.mubr.bf16.mxu0 0
        %1908 = vmatmul.mubr.bf16.gmra.mrb[0].mxu0 %v1813
        %v1909 = vpop.f32.mrb[0].mxu0
        %v1910 = vadd.f32 0.0, %v1909
        %v1911 = vpop.f32.mrb[0].mxu0
        %v1912 = vpop.f32.mrb[0].mxu0
        %v1913 = vadd.f32 0.0, %v1912
        %v1914 = vpop.f32.mrb[0].mxu0
        %1915 = vmatprep.mubr.bf16.mxu0 0
        %1916 = vmatmul.mubr.bf16.gmra.mrb[0].mxu0 %v1815
        %v1917 = vpop.f32.mrb[0].mxu0
        %v1918 = vadd.f32 0.0, %v1917
        %v1919 = vpop.f32.mrb[0].mxu0
        %v1920 = vpop.f32.mrb[0].mxu0
        %v1921 = vadd.f32 0.0, %v1920
        %v1922 = vpop.f32.mrb[0].mxu0
        %1923 = vdwg.mxu0
        %v1924 = vadd.f32 %v1784, %v1902
        %v1925 = vadd.f32 %v1785, %v1905
        %v1926 = vadd.f32 %v1786, %v1910
        %v1927 = vadd.f32 %v1787, %v1913
        %v1928 = vadd.f32 %v1788, %v1918
        %v1929 = vadd.f32 %v1789, %v1921
        %s1930 = scalar_lea.vmem [#allocation10], 256
        %v1931 = vld [vmem:[%s1930] sm:$0xf]
        %v1932 = vld [vmem:[%s1930 + $0x4] sm:$0xf]
        %v1933 = vld [vmem:[%s1930 + $0x8] sm:$0xf]
        %v1934 = vld [vmem:[%s1930 + $0xc] sm:$0xf]
        %v1935 = vld [vmem:[%s1930 + $0x10] sm:$0xf]
        %v1936 = vld [vmem:[%s1930 + $0x14] sm:$0xf]
        %v1937 = vld [vmem:[%s1930 + $0x18] sm:$0xf]
        %v1938 = vld [vmem:[%s1930 + $0x1c] sm:$0xf]
        %v1939 = vld [vmem:[%s1930 + $0x20] sm:$0xf]
        %v1940 = vld [vmem:[%s1930 + $0x24] sm:$0xf]
        %v1941 = vld [vmem:[%s1930 + $0x28] sm:$0xf]
        %v1942 = vld [vmem:[%s1930 + $0x2c] sm:$0xf]
        %v1943 = vld [vmem:[%s1930 + $0x30] sm:$0xf]
        %v1944 = vld [vmem:[%s1930 + $0x34] sm:$0xf]
        %v1945 = vld [vmem:[%s1930 + $0x38] sm:$0xf]
        %v1946 = vld [vmem:[%s1930 + $0x3c] sm:$0xf]
        %v1947 = vrot.slane %v1358, 1
        %v1948 = vrot.slane %v1359, 1
        %v1949 = vsel %vm1224, %v1947, %v1948
        %v1950 = vrot.slane %v1360, 1
        %v1951 = vsel %vm1224, %v1948, %v1950
        %v1952 = vsel %vm1224, %v1950, %v1230
        %v1972 = vunpack.c.l.b16 %v1931
        %v1973 = vunpack.c.l.b16 %v1932
        %v1974 = vunpack.c.l.b16 %v1933
        %v1975 = vunpack.c.l.b16 %v1934
        %v1976 = vunpack.c.l.b16 %v1935
        %v1977 = vunpack.c.l.b16 %v1936
        %v1978 = vunpack.c.l.b16 %v1937
        %v1979 = vunpack.c.l.b16 %v1938
        %v1980 = vunpack.c.l.b16 %v1939
        %v1981 = vunpack.c.l.b16 %v1940
        %v1982 = vunpack.c.l.b16 %v1941
        %v1983 = vunpack.c.l.b16 %v1942
        %v1984 = vunpack.c.l.b16 %v1943
        %v1985 = vunpack.c.l.b16 %v1944
        %v1986 = vunpack.c.l.b16 %v1945
        %v1987 = vunpack.c.l.b16 %v1946
        %v1988 = vpack.c.b16 %v1973, %v1972
        %v1989 = vpack.c.b16 %v1975, %v1974
        %v1990 = vpack.c.b16 %v1977, %v1976
        %v1991 = vpack.c.b16 %v1979, %v1978
        %v1992 = vpack.c.b16 %v1981, %v1980
        %v1993 = vpack.c.b16 %v1983, %v1982
        %v1994 = vpack.c.b16 %v1985, %v1984
        %v1995 = vpack.c.b16 %v1987, %v1986
        %2004 = vmatprep.subr.bf16.mxu0 0
        %2005 = vmatpush1.bf16.msra.mxu0 %v1988
        %2006 = vmatprep.subr.bf16.mxu0 0
        %2007 = vmatpush1.bf16.msra.mxu0 %v1989
        %2008 = vmatprep.subr.bf16.mxu0 0
        %2009 = vmatpush1.bf16.msra.mxu0 %v1990
        %2010 = vmatprep.subr.bf16.mxu0 0
        %2011 = vmatpush1.bf16.msra.mxu0 %v1991
        %2012 = vmatprep.subr.bf16.mxu0 0
        %2013 = vmatpush1.bf16.msra.mxu0 %v1992
        %2014 = vmatprep.subr.bf16.mxu0 0
        %2015 = vmatpush1.bf16.msra.mxu0 %v1993
        %2016 = vmatprep.subr.bf16.mxu0 0
        %2017 = vmatpush1.bf16.msra.mxu0 %v1994
        %2018 = vmatprep.subr.bf16.mxu0 0
        %2019 = vmatpush1.bf16.msra.mxu0 %v1995
        %2020 = vmatprep.subr.bf16.mxu0 0
        %2021 = vmatpush1.bf16.msra.mxu0 0
        %2022 = vmatprep.subr.bf16.mxu0 0
        %2023 = vmatpush1.bf16.msra.mxu0 0
        %2024 = vmatprep.subr.bf16.mxu0 0
        %2025 = vmatpush1.bf16.msra.mxu0 0
        %2026 = vmatprep.subr.bf16.mxu0 0
        %2027 = vmatpush1.bf16.msra.mxu0 0
        %2028 = vmatprep.subr.bf16.mxu0 0
        %2029 = vmatpush1.bf16.msra.mxu0 0
        %2030 = vmatprep.subr.bf16.mxu0 0
        %2031 = vmatpush1.bf16.msra.mxu0 0
        %2032 = vmatprep.subr.bf16.mxu0 0
        %2033 = vmatpush1.bf16.msra.mxu0 0
        %2034 = vmatprep.subr.bf16.mxu0 0
        %2035 = vmatpush1.bf16.msra.mxu0 0
        %2036 = vmatprep.mubr.bf16.mxu0 0
        %2037 = vmatmul.mubr.bf16.gmra.mrb[0].mxu0 %v1949
        %v2038 = vpop.f32.mrb[0].mxu0
        %v2039 = vadd.f32 0.0, %v2038
        %v2040 = vpop.f32.mrb[0].mxu0
        %v2041 = vpop.f32.mrb[0].mxu0
        %v2042 = vadd.f32 0.0, %v2041
        %v2043 = vpop.f32.mrb[0].mxu0
        %2044 = vmatprep.mubr.bf16.mxu0 0
        %2045 = vmatmul.mubr.bf16.gmra.mrb[0].mxu0 %v1951
        %v2046 = vpop.f32.mrb[0].mxu0
        %v2047 = vadd.f32 0.0, %v2046
        %v2048 = vpop.f32.mrb[0].mxu0
        %v2049 = vpop.f32.mrb[0].mxu0
        %v2050 = vadd.f32 0.0, %v2049
        %v2051 = vpop.f32.mrb[0].mxu0
        %2052 = vmatprep.mubr.bf16.mxu0 0
        %2053 = vmatmul.mubr.bf16.gmra.mrb[0].mxu0 %v1952
        %v2054 = vpop.f32.mrb[0].mxu0
        %v2055 = vadd.f32 0.0, %v2054
        %v2056 = vpop.f32.mrb[0].mxu0
        %v2057 = vpop.f32.mrb[0].mxu0
        %v2058 = vadd.f32 0.0, %v2057
        %v2059 = vpop.f32.mrb[0].mxu0
        %2060 = vdwg.mxu0
        %v2061 = vadd.f32 %v1924, %v2039
        %v2062 = vadd.f32 %v1925, %v2042
        %v2063 = vadd.f32 %v1926, %v2047
        %v2064 = vadd.f32 %v1927, %v2050
        %v2065 = vadd.f32 %v1928, %v2055
        %v2066 = vadd.f32 %v1929, %v2058
        %v2067 = vtanh.pop %v2061
        %v2068 = vtanh.pop %v2062
        %v2069 = vtanh.pop %v2063
        %v2070 = vtanh.pop %v2064
        %v2071 = vtanh.pop %v2065
        %v2072 = vtanh.pop %v2066
        %v2073 = vsel %vm593, %v2067, 0.0
        %v2074 = vsel %vm594, %v2068, 0.0
        %v2075 = vsel %vm595, %v2069, 0.0
        %v2076 = vsel %vm596, %v2070, 0.0
        %v2077 = vsel %vm597, %v2071, 0.0
        %v2078 = vsel %vm598, %v2072, 0.0
        %v2079 = vpack.c.bf16 %v2074, %v2073
        %v2080 = vpack.c.bf16 %v2076, %v2075
        %v2081 = vpack.c.bf16 %v2078, %v2077
        %v2082 = vld [vmem:[%s8] sm:$0x1]
        %v2084 = vlaneseq
        %v2085 = vshrl.u32 %v2084, 7
        %v2086 = vsub.s32 0, %v2085
        %v2087 = vrot.slane %v2082, %v2086
        %v2089 = vld [vmem:[#allocation11] sm:$0xf]
        %v2090 = vld [vmem:[#allocation11 + $0x4] sm:$0xf]
        %v2091 = vld [vmem:[#allocation11 + $0x8] sm:$0xf]
        %v2092 = vld [vmem:[#allocation11 + $0xc] sm:$0xf]
        %v2093 = vld [vmem:[#allocation11 + $0x10] sm:$0xf]
        %v2094 = vld [vmem:[#allocation11 + $0x14] sm:$0xf]
        %v2095 = vld [vmem:[#allocation11 + $0x18] sm:$0xf]
        %v2096 = vld [vmem:[#allocation11 + $0x1c] sm:$0xf]
        %v2097 = vld [vmem:[#allocation11 + $0x20] sm:$0xf]
        %v2098 = vld [vmem:[#allocation11 + $0x24] sm:$0xf]
        %v2099 = vld [vmem:[#allocation11 + $0x28] sm:$0xf]
        %v2100 = vld [vmem:[#allocation11 + $0x2c] sm:$0xf]
        %v2101 = vld [vmem:[#allocation11 + $0x30] sm:$0xf]
        %v2102 = vld [vmem:[#allocation11 + $0x34] sm:$0xf]
        %v2103 = vld [vmem:[#allocation11 + $0x38] sm:$0xf]
        %v2104 = vld [vmem:[#allocation11 + $0x3c] sm:$0xf]
        %v2108 = vrot.slane %v2079, 7
        %v2109 = vsel %vm653, %v654, %v2108
        %v2110 = vrot.slane %v2080, 7
        %v2111 = vsel %vm653, %v2108, %v2110
        %v2112 = vrot.slane %v2081, 7
        %v2113 = vsel %vm653, %v2110, %v2112
        %v2133 = vunpack.c.l.b16 %v2089
        %v2134 = vunpack.c.l.b16 %v2090
        %v2135 = vunpack.c.l.b16 %v2091
        %v2136 = vunpack.c.l.b16 %v2092
        %v2137 = vunpack.c.l.b16 %v2093
        %v2138 = vunpack.c.l.b16 %v2094
        %v2139 = vunpack.c.l.b16 %v2095
        %v2140 = vunpack.c.l.b16 %v2096
        %v2141 = vunpack.c.l.b16 %v2097
        %v2142 = vunpack.c.l.b16 %v2098
        %v2143 = vunpack.c.l.b16 %v2099
        %v2144 = vunpack.c.l.b16 %v2100
        %v2145 = vunpack.c.l.b16 %v2101
        %v2146 = vunpack.c.l.b16 %v2102
        %v2147 = vunpack.c.l.b16 %v2103
        %v2148 = vunpack.c.l.b16 %v2104
        %v2149 = vpack.c.b16 %v2134, %v2133
        %v2150 = vpack.c.b16 %v2136, %v2135
        %v2151 = vpack.c.b16 %v2138, %v2137
        %v2152 = vpack.c.b16 %v2140, %v2139
        %v2153 = vpack.c.b16 %v2142, %v2141
        %v2154 = vpack.c.b16 %v2144, %v2143
        %v2155 = vpack.c.b16 %v2146, %v2145
        %v2156 = vpack.c.b16 %v2148, %v2147
        %2165 = vmatprep.subr.bf16.mxu0 0
        %2166 = vmatpush1.bf16.msra.mxu0 %v2149
        %2167 = vmatprep.subr.bf16.mxu0 0
        %2168 = vmatpush1.bf16.msra.mxu0 %v2150
        %2169 = vmatprep.subr.bf16.mxu0 0
        %2170 = vmatpush1.bf16.msra.mxu0 %v2151
        %2171 = vmatprep.subr.bf16.mxu0 0
        %2172 = vmatpush1.bf16.msra.mxu0 %v2152
        %2173 = vmatprep.subr.bf16.mxu0 0
        %2174 = vmatpush1.bf16.msra.mxu0 %v2153
        %2175 = vmatprep.subr.bf16.mxu0 0
        %2176 = vmatpush1.bf16.msra.mxu0 %v2154
        %2177 = vmatprep.subr.bf16.mxu0 0
        %2178 = vmatpush1.bf16.msra.mxu0 %v2155
        %2179 = vmatprep.subr.bf16.mxu0 0
        %2180 = vmatpush1.bf16.msra.mxu0 %v2156
        %2181 = vmatprep.subr.bf16.mxu0 0
        %2182 = vmatpush1.bf16.msra.mxu0 0
        %2183 = vmatprep.subr.bf16.mxu0 0
        %2184 = vmatpush1.bf16.msra.mxu0 0
        %2185 = vmatprep.subr.bf16.mxu0 0
        %2186 = vmatpush1.bf16.msra.mxu0 0
        %2187 = vmatprep.subr.bf16.mxu0 0
        %2188 = vmatpush1.bf16.msra.mxu0 0
        %2189 = vmatprep.subr.bf16.mxu0 0
        %2190 = vmatpush1.bf16.msra.mxu0 0
        %2191 = vmatprep.subr.bf16.mxu0 0
        %2192 = vmatpush1.bf16.msra.mxu0 0
        %2193 = vmatprep.subr.bf16.mxu0 0
        %2194 = vmatpush1.bf16.msra.mxu0 0
        %2195 = vmatprep.subr.bf16.mxu0 0
        %2196 = vmatpush1.bf16.msra.mxu0 0
        %2197 = vmatprep.mubr.bf16.mxu0 0
        %2198 = vmatmul.mubr.bf16.gmra.mrb[0].mxu0 %v2109
        %v2199 = vpop.f32.mrb[0].mxu0
        %v2200 = vpop.f32.mrb[0].mxu0
        %v2201 = vpop.f32.mrb[0].mxu0
        %v2202 = vpop.f32.mrb[0].mxu0
        %2203 = vmatprep.mubr.bf16.mxu0 0
        %2204 = vmatmul.mubr.bf16.gmra.mrb[0].mxu0 %v2111
        %v2205 = vpop.f32.mrb[0].mxu0
        %v2206 = vadd.f32 0.0, %v2205
        %v2207 = vpop.f32.mrb[0].mxu0
        %v2208 = vpop.f32.mrb[0].mxu0
        %v2209 = vadd.f32 0.0, %v2208
        %v2210 = vpop.f32.mrb[0].mxu0
        %2211 = vmatprep.mubr.bf16.mxu0 0
        %2212 = vmatmul.mubr.bf16.gmra.mrb[0].mxu0 %v2113
        %v2213 = vpop.f32.mrb[0].mxu0
        %v2214 = vpop.f32.mrb[0].mxu0
        %v2215 = vpop.f32.mrb[0].mxu0
        %v2216 = vpop.f32.mrb[0].mxu0
        %2217 = vdwg.mxu0
        %v2218 = vadd.f32 %v2087, %v2206
        %v2219 = vadd.f32 %v2087, %v2209
        %s2220 = scalar_lea.vmem [#allocation11], 64
        %v2221 = vld [vmem:[%s2220] sm:$0xf]
        %v2222 = vld [vmem:[%s2220 + $0x4] sm:$0xf]
        %v2223 = vld [vmem:[%s2220 + $0x8] sm:$0xf]
        %v2224 = vld [vmem:[%s2220 + $0xc] sm:$0xf]
        %v2225 = vld [vmem:[%s2220 + $0x10] sm:$0xf]
        %v2226 = vld [vmem:[%s2220 + $0x14] sm:$0xf]
        %v2227 = vld [vmem:[%s2220 + $0x18] sm:$0xf]
        %v2228 = vld [vmem:[%s2220 + $0x1c] sm:$0xf]
        %v2229 = vld [vmem:[%s2220 + $0x20] sm:$0xf]
        %v2230 = vld [vmem:[%s2220 + $0x24] sm:$0xf]
        %v2231 = vld [vmem:[%s2220 + $0x28] sm:$0xf]
        %v2232 = vld [vmem:[%s2220 + $0x2c] sm:$0xf]
        %v2233 = vld [vmem:[%s2220 + $0x30] sm:$0xf]
        %v2234 = vld [vmem:[%s2220 + $0x34] sm:$0xf]
        %v2235 = vld [vmem:[%s2220 + $0x38] sm:$0xf]
        %v2236 = vld [vmem:[%s2220 + $0x3c] sm:$0xf]
        %v2238 = vshrl.u32 %v2079, 16
        %v2240 = vrot.slane %v2238, 7
        %v2241 = vshll.u32 %v2079, 16
        %v2243 = vor.u32 %v2240, %v2241
        %v2244 = vsel %vm792, %v796, %v2243
        %v2246 = vshrl.u32 %v2080, 16
        %v2248 = vrot.slane %v2246, 7
        %v2249 = vshll.u32 %v2080, 16
        %v2251 = vor.u32 %v2248, %v2249
        %v2252 = vsel %vm792, %v2240, %v2251
        %v2254 = vshrl.u32 %v2081, 16
        %v2256 = vrot.slane %v2254, 7
        %v2257 = vshll.u32 %v2081, 16
        %v2259 = vor.u32 %v2256, %v2257
        %v2260 = vsel %vm792, %v2248, %v2259
        %v2280 = vunpack.c.l.b16 %v2221
        %v2281 = vunpack.c.l.b16 %v2222
        %v2282 = vunpack.c.l.b16 %v2223
        %v2283 = vunpack.c.l.b16 %v2224
        %v2284 = vunpack.c.l.b16 %v2225
        %v2285 = vunpack.c.l.b16 %v2226
        %v2286 = vunpack.c.l.b16 %v2227
        %v2287 = vunpack.c.l.b16 %v2228
        %v2288 = vunpack.c.l.b16 %v2229
        %v2289 = vunpack.c.l.b16 %v2230
        %v2290 = vunpack.c.l.b16 %v2231
        %v2291 = vunpack.c.l.b16 %v2232
        %v2292 = vunpack.c.l.b16 %v2233
        %v2293 = vunpack.c.l.b16 %v2234
        %v2294 = vunpack.c.l.b16 %v2235
        %v2295 = vunpack.c.l.b16 %v2236
        %v2296 = vpack.c.b16 %v2281, %v2280
        %v2297 = vpack.c.b16 %v2283, %v2282
        %v2298 = vpack.c.b16 %v2285, %v2284
        %v2299 = vpack.c.b16 %v2287, %v2286
        %v2300 = vpack.c.b16 %v2289, %v2288
        %v2301 = vpack.c.b16 %v2291, %v2290
        %v2302 = vpack.c.b16 %v2293, %v2292
        %v2303 = vpack.c.b16 %v2295, %v2294
        %2312 = vmatprep.subr.bf16.mxu0 0
        %2313 = vmatpush1.bf16.msra.mxu0 %v2296
        %2314 = vmatprep.subr.bf16.mxu0 0
        %2315 = vmatpush1.bf16.msra.mxu0 %v2297
        %2316 = vmatprep.subr.bf16.mxu0 0
        %2317 = vmatpush1.bf16.msra.mxu0 %v2298
        %2318 = vmatprep.subr.bf16.mxu0 0
        %2319 = vmatpush1.bf16.msra.mxu0 %v2299
        %2320 = vmatprep.subr.bf16.mxu0 0
        %2321 = vmatpush1.bf16.msra.mxu0 %v2300
        %2322 = vmatprep.subr.bf16.mxu0 0
        %2323 = vmatpush1.bf16.msra.mxu0 %v2301
        %2324 = vmatprep.subr.bf16.mxu0 0
        %2325 = vmatpush1.bf16.msra.mxu0 %v2302
        %2326 = vmatprep.subr.bf16.mxu0 0
        %2327 = vmatpush1.bf16.msra.mxu0 %v2303
        %2328 = vmatprep.subr.bf16.mxu0 0
        %2329 = vmatpush1.bf16.msra.mxu0 0
        %2330 = vmatprep.subr.bf16.mxu0 0
        %2331 = vmatpush1.bf16.msra.mxu0 0
        %2332 = vmatprep.subr.bf16.mxu0 0
        %2333 = vmatpush1.bf16.msra.mxu0 0
        %2334 = vmatprep.subr.bf16.mxu0 0
        %2335 = vmatpush1.bf16.msra.mxu0 0
        %2336 = vmatprep.subr.bf16.mxu0 0
        %2337 = vmatpush1.bf16.msra.mxu0 0
        %2338 = vmatprep.subr.bf16.mxu0 0
        %2339 = vmatpush1.bf16.msra.mxu0 0
        %2340 = vmatprep.subr.bf16.mxu0 0
        %2341 = vmatpush1.bf16.msra.mxu0 0
        %2342 = vmatprep.subr.bf16.mxu0 0
        %2343 = vmatpush1.bf16.msra.mxu0 0
        %2344 = vmatprep.mubr.bf16.mxu0 0
        %2345 = vmatmul.mubr.bf16.gmra.mrb[0].mxu0 %v2244
        %v2346 = vpop.f32.mrb[0].mxu0
        %v2347 = vpop.f32.mrb[0].mxu0
        %v2348 = vpop.f32.mrb[0].mxu0
        %v2349 = vpop.f32.mrb[0].mxu0
        %2350 = vmatprep.mubr.bf16.mxu0 0
        %2351 = vmatmul.mubr.bf16.gmra.mrb[0].mxu0 %v2252
        %v2352 = vpop.f32.mrb[0].mxu0
        %v2353 = vadd.f32 0.0, %v2352
        %v2354 = vpop.f32.mrb[0].mxu0
        %v2355 = vpop.f32.mrb[0].mxu0
        %v2356 = vadd.f32 0.0, %v2355
        %v2357 = vpop.f32.mrb[0].mxu0
        %2358 = vmatprep.mubr.bf16.mxu0 0
        %2359 = vmatmul.mubr.bf16.gmra.mrb[0].mxu0 %v2260
        %v2360 = vpop.f32.mrb[0].mxu0
        %v2361 = vpop.f32.mrb[0].mxu0
        %v2362 = vpop.f32.mrb[0].mxu0
        %v2363 = vpop.f32.mrb[0].mxu0
        %2364 = vdwg.mxu0
        %v2365 = vadd.f32 %v2218, %v2353
        %v2366 = vadd.f32 %v2219, %v2356
        %s2367 = scalar_lea.vmem [#allocation11], 128
        %v2368 = vld [vmem:[%s2367] sm:$0xf]
        %v2369 = vld [vmem:[%s2367 + $0x4] sm:$0xf]
        %v2370 = vld [vmem:[%s2367 + $0x8] sm:$0xf]
        %v2371 = vld [vmem:[%s2367 + $0xc] sm:$0xf]
        %v2372 = vld [vmem:[%s2367 + $0x10] sm:$0xf]
        %v2373 = vld [vmem:[%s2367 + $0x14] sm:$0xf]
        %v2374 = vld [vmem:[%s2367 + $0x18] sm:$0xf]
        %v2375 = vld [vmem:[%s2367 + $0x1c] sm:$0xf]
        %v2376 = vld [vmem:[%s2367 + $0x20] sm:$0xf]
        %v2377 = vld [vmem:[%s2367 + $0x24] sm:$0xf]
        %v2378 = vld [vmem:[%s2367 + $0x28] sm:$0xf]
        %v2379 = vld [vmem:[%s2367 + $0x2c] sm:$0xf]
        %v2380 = vld [vmem:[%s2367 + $0x30] sm:$0xf]
        %v2381 = vld [vmem:[%s2367 + $0x34] sm:$0xf]
        %v2382 = vld [vmem:[%s2367 + $0x38] sm:$0xf]
        %v2383 = vld [vmem:[%s2367 + $0x3c] sm:$0xf]
        %v2400 = vunpack.c.l.b16 %v2368
        %v2401 = vunpack.c.l.b16 %v2369
        %v2402 = vunpack.c.l.b16 %v2370
        %v2403 = vunpack.c.l.b16 %v2371
        %v2404 = vunpack.c.l.b16 %v2372
        %v2405 = vunpack.c.l.b16 %v2373
        %v2406 = vunpack.c.l.b16 %v2374
        %v2407 = vunpack.c.l.b16 %v2375
        %v2408 = vunpack.c.l.b16 %v2376
        %v2409 = vunpack.c.l.b16 %v2377
        %v2410 = vunpack.c.l.b16 %v2378
        %v2411 = vunpack.c.l.b16 %v2379
        %v2412 = vunpack.c.l.b16 %v2380
        %v2413 = vunpack.c.l.b16 %v2381
        %v2414 = vunpack.c.l.b16 %v2382
        %v2415 = vunpack.c.l.b16 %v2383
        %v2416 = vpack.c.b16 %v2401, %v2400
        %v2417 = vpack.c.b16 %v2403, %v2402
        %v2418 = vpack.c.b16 %v2405, %v2404
        %v2419 = vpack.c.b16 %v2407, %v2406
        %v2420 = vpack.c.b16 %v2409, %v2408
        %v2421 = vpack.c.b16 %v2411, %v2410
        %v2422 = vpack.c.b16 %v2413, %v2412
        %v2423 = vpack.c.b16 %v2415, %v2414
        %2432 = vmatprep.subr.bf16.mxu0 0
        %2433 = vmatpush1.bf16.msra.mxu0 %v2416
        %2434 = vmatprep.subr.bf16.mxu0 0
        %2435 = vmatpush1.bf16.msra.mxu0 %v2417
        %2436 = vmatprep.subr.bf16.mxu0 0
        %2437 = vmatpush1.bf16.msra.mxu0 %v2418
        %2438 = vmatprep.subr.bf16.mxu0 0
        %2439 = vmatpush1.bf16.msra.mxu0 %v2419
        %2440 = vmatprep.subr.bf16.mxu0 0
        %2441 = vmatpush1.bf16.msra.mxu0 %v2420
        %2442 = vmatprep.subr.bf16.mxu0 0
        %2443 = vmatpush1.bf16.msra.mxu0 %v2421
        %2444 = vmatprep.subr.bf16.mxu0 0
        %2445 = vmatpush1.bf16.msra.mxu0 %v2422
        %2446 = vmatprep.subr.bf16.mxu0 0
        %2447 = vmatpush1.bf16.msra.mxu0 %v2423
        %2448 = vmatprep.subr.bf16.mxu0 0
        %2449 = vmatpush1.bf16.msra.mxu0 0
        %2450 = vmatprep.subr.bf16.mxu0 0
        %2451 = vmatpush1.bf16.msra.mxu0 0
        %2452 = vmatprep.subr.bf16.mxu0 0
        %2453 = vmatpush1.bf16.msra.mxu0 0
        %2454 = vmatprep.subr.bf16.mxu0 0
        %2455 = vmatpush1.bf16.msra.mxu0 0
        %2456 = vmatprep.subr.bf16.mxu0 0
        %2457 = vmatpush1.bf16.msra.mxu0 0
        %2458 = vmatprep.subr.bf16.mxu0 0
        %2459 = vmatpush1.bf16.msra.mxu0 0
        %2460 = vmatprep.subr.bf16.mxu0 0
        %2461 = vmatpush1.bf16.msra.mxu0 0
        %2462 = vmatprep.subr.bf16.mxu0 0
        %2463 = vmatpush1.bf16.msra.mxu0 0
        %2464 = vmatprep.mubr.bf16.mxu0 0
        %2465 = vmatmul.mubr.bf16.gmra.mrb[0].mxu0 %v2079
        %v2466 = vpop.f32.mrb[0].mxu0
        %v2467 = vpop.f32.mrb[0].mxu0
        %v2468 = vpop.f32.mrb[0].mxu0
        %v2469 = vpop.f32.mrb[0].mxu0
        %2470 = vmatprep.mubr.bf16.mxu0 0
        %2471 = vmatmul.mubr.bf16.gmra.mrb[0].mxu0 %v2080
        %v2472 = vpop.f32.mrb[0].mxu0
        %v2473 = vadd.f32 0.0, %v2472
        %v2474 = vpop.f32.mrb[0].mxu0
        %v2475 = vpop.f32.mrb[0].mxu0
        %v2476 = vadd.f32 0.0, %v2475
        %v2477 = vpop.f32.mrb[0].mxu0
        %2478 = vmatprep.mubr.bf16.mxu0 0
        %2479 = vmatmul.mubr.bf16.gmra.mrb[0].mxu0 %v2081
        %v2480 = vpop.f32.mrb[0].mxu0
        %v2481 = vpop.f32.mrb[0].mxu0
        %v2482 = vpop.f32.mrb[0].mxu0
        %v2483 = vpop.f32.mrb[0].mxu0
        %2484 = vdwg.mxu0
        %v2485 = vadd.f32 %v2365, %v2473
        %v2486 = vadd.f32 %v2366, %v2476
        %s2487 = scalar_lea.vmem [#allocation11], 192
        %v2488 = vld [vmem:[%s2487] sm:$0xf]
        %v2489 = vld [vmem:[%s2487 + $0x4] sm:$0xf]
        %v2490 = vld [vmem:[%s2487 + $0x8] sm:$0xf]
        %v2491 = vld [vmem:[%s2487 + $0xc] sm:$0xf]
        %v2492 = vld [vmem:[%s2487 + $0x10] sm:$0xf]
        %v2493 = vld [vmem:[%s2487 + $0x14] sm:$0xf]
        %v2494 = vld [vmem:[%s2487 + $0x18] sm:$0xf]
        %v2495 = vld [vmem:[%s2487 + $0x1c] sm:$0xf]
        %v2496 = vld [vmem:[%s2487 + $0x20] sm:$0xf]
        %v2497 = vld [vmem:[%s2487 + $0x24] sm:$0xf]
        %v2498 = vld [vmem:[%s2487 + $0x28] sm:$0xf]
        %v2499 = vld [vmem:[%s2487 + $0x2c] sm:$0xf]
        %v2500 = vld [vmem:[%s2487 + $0x30] sm:$0xf]
        %v2501 = vld [vmem:[%s2487 + $0x34] sm:$0xf]
        %v2502 = vld [vmem:[%s2487 + $0x38] sm:$0xf]
        %v2503 = vld [vmem:[%s2487 + $0x3c] sm:$0xf]
        %v2504 = vrot.slane %v2241, 1
        %v2505 = vor.u32 %v2238, %v2504
        %v2506 = vrot.slane %v2249, 1
        %v2507 = vsel %vm1080, %v2505, %v2506
        %v2508 = vor.u32 %v2246, %v2506
        %v2509 = vrot.slane %v2257, 1
        %v2510 = vsel %vm1080, %v2508, %v2509
        %v2511 = vor.u32 %v2254, %v2509
        %v2512 = vsel %vm1080, %v2511, %v1091
        %v2532 = vunpack.c.l.b16 %v2488
        %v2533 = vunpack.c.l.b16 %v2489
        %v2534 = vunpack.c.l.b16 %v2490
        %v2535 = vunpack.c.l.b16 %v2491
        %v2536 = vunpack.c.l.b16 %v2492
        %v2537 = vunpack.c.l.b16 %v2493
        %v2538 = vunpack.c.l.b16 %v2494
        %v2539 = vunpack.c.l.b16 %v2495
        %v2540 = vunpack.c.l.b16 %v2496
        %v2541 = vunpack.c.l.b16 %v2497
        %v2542 = vunpack.c.l.b16 %v2498
        %v2543 = vunpack.c.l.b16 %v2499
        %v2544 = vunpack.c.l.b16 %v2500
        %v2545 = vunpack.c.l.b16 %v2501
        %v2546 = vunpack.c.l.b16 %v2502
        %v2547 = vunpack.c.l.b16 %v2503
        %v2548 = vpack.c.b16 %v2533, %v2532
        %v2549 = vpack.c.b16 %v2535, %v2534
        %v2550 = vpack.c.b16 %v2537, %v2536
        %v2551 = vpack.c.b16 %v2539, %v2538
        %v2552 = vpack.c.b16 %v2541, %v2540
        %v2553 = vpack.c.b16 %v2543, %v2542
        %v2554 = vpack.c.b16 %v2545, %v2544
        %v2555 = vpack.c.b16 %v2547, %v2546
        %2564 = vmatprep.subr.bf16.mxu0 0
        %2565 = vmatpush1.bf16.msra.mxu0 %v2548
        %2566 = vmatprep.subr.bf16.mxu0 0
        %2567 = vmatpush1.bf16.msra.mxu0 %v2549
        %2568 = vmatprep.subr.bf16.mxu0 0
        %2569 = vmatpush1.bf16.msra.mxu0 %v2550
        %2570 = vmatprep.subr.bf16.mxu0 0
        %2571 = vmatpush1.bf16.msra.mxu0 %v2551
        %2572 = vmatprep.subr.bf16.mxu0 0
        %2573 = vmatpush1.bf16.msra.mxu0 %v2552
        %2574 = vmatprep.subr.bf16.mxu0 0
        %2575 = vmatpush1.bf16.msra.mxu0 %v2553
        %2576 = vmatprep.subr.bf16.mxu0 0
        %2577 = vmatpush1.bf16.msra.mxu0 %v2554
        %2578 = vmatprep.subr.bf16.mxu0 0
        %2579 = vmatpush1.bf16.msra.mxu0 %v2555
        %2580 = vmatprep.subr.bf16.mxu0 0
        %2581 = vmatpush1.bf16.msra.mxu0 0
        %2582 = vmatprep.subr.bf16.mxu0 0
        %2583 = vmatpush1.bf16.msra.mxu0 0
        %2584 = vmatprep.subr.bf16.mxu0 0
        %2585 = vmatpush1.bf16.msra.mxu0 0
        %2586 = vmatprep.subr.bf16.mxu0 0
        %2587 = vmatpush1.bf16.msra.mxu0 0
        %2588 = vmatprep.subr.bf16.mxu0 0
        %2589 = vmatpush1.bf16.msra.mxu0 0
        %2590 = vmatprep.subr.bf16.mxu0 0
        %2591 = vmatpush1.bf16.msra.mxu0 0
        %2592 = vmatprep.subr.bf16.mxu0 0
        %2593 = vmatpush1.bf16.msra.mxu0 0
        %2594 = vmatprep.subr.bf16.mxu0 0
        %2595 = vmatpush1.bf16.msra.mxu0 0
        %2596 = vmatprep.mubr.bf16.mxu0 0
        %2597 = vmatmul.mubr.bf16.gmra.mrb[0].mxu0 %v2507
        %v2598 = vpop.f32.mrb[0].mxu0
        %v2599 = vpop.f32.mrb[0].mxu0
        %v2600 = vpop.f32.mrb[0].mxu0
        %v2601 = vpop.f32.mrb[0].mxu0
        %2602 = vmatprep.mubr.bf16.mxu0 0
        %2603 = vmatmul.mubr.bf16.gmra.mrb[0].mxu0 %v2510
        %v2604 = vpop.f32.mrb[0].mxu0
        %v2605 = vadd.f32 0.0, %v2604
        %v2606 = vpop.f32.mrb[0].mxu0
        %v2607 = vpop.f32.mrb[0].mxu0
        %v2608 = vadd.f32 0.0, %v2607
        %v2609 = vpop.f32.mrb[0].mxu0
        %2610 = vmatprep.mubr.bf16.mxu0 0
        %2611 = vmatmul.mubr.bf16.gmra.mrb[0].mxu0 %v2512
        %v2612 = vpop.f32.mrb[0].mxu0
        %v2613 = vpop.f32.mrb[0].mxu0
        %v2614 = vpop.f32.mrb[0].mxu0
        %v2615 = vpop.f32.mrb[0].mxu0
        %2616 = vdwg.mxu0
        %v2617 = vadd.f32 %v2485, %v2605
        %v2618 = vadd.f32 %v2486, %v2608
        %s2619 = scalar_lea.vmem [#allocation11], 256
        %v2620 = vld [vmem:[%s2619] sm:$0xf]
        %v2621 = vld [vmem:[%s2619 + $0x4] sm:$0xf]
        %v2622 = vld [vmem:[%s2619 + $0x8] sm:$0xf]
        %v2623 = vld [vmem:[%s2619 + $0xc] sm:$0xf]
        %v2624 = vld [vmem:[%s2619 + $0x10] sm:$0xf]
        %v2625 = vld [vmem:[%s2619 + $0x14] sm:$0xf]
        %v2626 = vld [vmem:[%s2619 + $0x18] sm:$0xf]
        %v2627 = vld [vmem:[%s2619 + $0x1c] sm:$0xf]
        %v2628 = vld [vmem:[%s2619 + $0x20] sm:$0xf]
        %v2629 = vld [vmem:[%s2619 + $0x24] sm:$0xf]
        %v2630 = vld [vmem:[%s2619 + $0x28] sm:$0xf]
        %v2631 = vld [vmem:[%s2619 + $0x2c] sm:$0xf]
        %v2632 = vld [vmem:[%s2619 + $0x30] sm:$0xf]
        %v2633 = vld [vmem:[%s2619 + $0x34] sm:$0xf]
        %v2634 = vld [vmem:[%s2619 + $0x38] sm:$0xf]
        %v2635 = vld [vmem:[%s2619 + $0x3c] sm:$0xf]
        %v2636 = vrot.slane %v2079, 1
        %v2637 = vrot.slane %v2080, 1
        %v2638 = vsel %vm1224, %v2636, %v2637
        %v2639 = vrot.slane %v2081, 1
        %v2640 = vsel %vm1224, %v2637, %v2639
        %v2641 = vsel %vm1224, %v2639, %v1230
        %v2661 = vunpack.c.l.b16 %v2620
        %v2662 = vunpack.c.l.b16 %v2621
        %v2663 = vunpack.c.l.b16 %v2622
        %v2664 = vunpack.c.l.b16 %v2623
        %v2665 = vunpack.c.l.b16 %v2624
        %v2666 = vunpack.c.l.b16 %v2625
        %v2667 = vunpack.c.l.b16 %v2626
        %v2668 = vunpack.c.l.b16 %v2627
        %v2669 = vunpack.c.l.b16 %v2628
        %v2670 = vunpack.c.l.b16 %v2629
        %v2671 = vunpack.c.l.b16 %v2630
        %v2672 = vunpack.c.l.b16 %v2631
        %v2673 = vunpack.c.l.b16 %v2632
        %v2674 = vunpack.c.l.b16 %v2633
        %v2675 = vunpack.c.l.b16 %v2634
        %v2676 = vunpack.c.l.b16 %v2635
        %v2677 = vpack.c.b16 %v2662, %v2661
        %v2678 = vpack.c.b16 %v2664, %v2663
        %v2679 = vpack.c.b16 %v2666, %v2665
        %v2680 = vpack.c.b16 %v2668, %v2667
        %v2681 = vpack.c.b16 %v2670, %v2669
        %v2682 = vpack.c.b16 %v2672, %v2671
        %v2683 = vpack.c.b16 %v2674, %v2673
        %v2684 = vpack.c.b16 %v2676, %v2675
        %2693 = vmatprep.subr.bf16.mxu0 0
        %2694 = vmatpush1.bf16.msra.mxu0 %v2677
        %2695 = vmatprep.subr.bf16.mxu0 0
        %2696 = vmatpush1.bf16.msra.mxu0 %v2678
        %2697 = vmatprep.subr.bf16.mxu0 0
        %2698 = vmatpush1.bf16.msra.mxu0 %v2679
        %2699 = vmatprep.subr.bf16.mxu0 0
        %2700 = vmatpush1.bf16.msra.mxu0 %v2680
        %2701 = vmatprep.subr.bf16.mxu0 0
        %2702 = vmatpush1.bf16.msra.mxu0 %v2681
        %2703 = vmatprep.subr.bf16.mxu0 0
        %2704 = vmatpush1.bf16.msra.mxu0 %v2682
        %2705 = vmatprep.subr.bf16.mxu0 0
        %2706 = vmatpush1.bf16.msra.mxu0 %v2683
        %2707 = vmatprep.subr.bf16.mxu0 0
        %2708 = vmatpush1.bf16.msra.mxu0 %v2684
        %2709 = vmatprep.subr.bf16.mxu0 0
        %2710 = vmatpush1.bf16.msra.mxu0 0
        %2711 = vmatprep.subr.bf16.mxu0 0
        %2712 = vmatpush1.bf16.msra.mxu0 0
        %2713 = vmatprep.subr.bf16.mxu0 0
        %2714 = vmatpush1.bf16.msra.mxu0 0
        %2715 = vmatprep.subr.bf16.mxu0 0
        %2716 = vmatpush1.bf16.msra.mxu0 0
        %2717 = vmatprep.subr.bf16.mxu0 0
        %2718 = vmatpush1.bf16.msra.mxu0 0
        %2719 = vmatprep.subr.bf16.mxu0 0
        %2720 = vmatpush1.bf16.msra.mxu0 0
        %2721 = vmatprep.subr.bf16.mxu0 0
        %2722 = vmatpush1.bf16.msra.mxu0 0
        %2723 = vmatprep.subr.bf16.mxu0 0
        %2724 = vmatpush1.bf16.msra.mxu0 0
        %2725 = vmatprep.mubr.bf16.mxu0 0
        %2726 = vmatmul.mubr.bf16.gmra.mrb[0].mxu0 %v2638
        %v2727 = vpop.f32.mrb[0].mxu0
        %v2728 = vpop.f32.mrb[0].mxu0
        %v2729 = vpop.f32.mrb[0].mxu0
        %v2730 = vpop.f32.mrb[0].mxu0
        %2731 = vmatprep.mubr.bf16.mxu0 0
        %2732 = vmatmul.mubr.bf16.gmra.mrb[0].mxu0 %v2640
        %v2733 = vpop.f32.mrb[0].mxu0
        %v2734 = vadd.f32 0.0, %v2733
        %v2735 = vpop.f32.mrb[0].mxu0
        %v2736 = vpop.f32.mrb[0].mxu0
        %v2737 = vadd.f32 0.0, %v2736
        %v2738 = vpop.f32.mrb[0].mxu0
        %2739 = vmatprep.mubr.bf16.mxu0 0
        %2740 = vmatmul.mubr.bf16.gmra.mrb[0].mxu0 %v2641
        %v2741 = vpop.f32.mrb[0].mxu0
        %v2742 = vpop.f32.mrb[0].mxu0
        %v2743 = vpop.f32.mrb[0].mxu0
        %v2744 = vpop.f32.mrb[0].mxu0
        %2745 = vdwg.mxu0
        %v2746 = vadd.f32 %v2617, %v2734
        %v2747 = vadd.f32 %v2618, %v2737
        %2748 = vst [vmem:[%s515] sm:$0xff] %v2746
        %2749 = vst [vmem:[%s515 + $0x8] sm:$0xff] %v2747
        %s2750 = sand.u32 %s275, 1
        %s2751 = scalar_lea.sflag [#allocation4], %s2750
        %s2752 = sand.u32 %s275, 1
        %s2753 = smul.addr %s2752, 16
        %s2754 = scalar_lea.vmem [#allocation13], %s2753
        // Predicated region
        $region81: #{tpu_custom_call.1} parent=55 // pred_check
          %p2755 = pneg %p285
        $region82: #{tpu_custom_call.1} parent=55 // pred_check_branch
          %2757 = sbr.rel (%p2755) target = $region84
        $region83: #{tpu_custom_call.1} parent=55 // pred_region
          %s2758 = smul.u32 2, %s36
          %s2760 = ssub.s32 256, 256
          %2761 = vsyncadd %s2751, %s2760
          %s2762 = smul.addr %s35, 2
          %s2763 = sadd.s32 %s2758, %s2762
          %s2764 = smul.addr %s2763, 128
          %s2765 = scalar_lea.hbm %s9, %s2764
          %s2766 = sshll.u32 %s2754, 4
          %s2767 = int_to_ptr.vmem [resolvable:$true] %s2766
          %2772 = dma.vmem_to_hbm [thread:$0]  %s2767, 256, %s2765, %s2751, 128, 128, 8
        $region84: #{tpu_custom_call.1} parent=55 // pred_fallthru
          _
      $region56: #{tpu_custom_call.1} parent=5 // pred_fallthru
        _
      %p2773 = scmp.le.s32.totalorder 2, %s26
      // Predicated region
      $region85: #{tpu_custom_call.1} parent=5 // pred_check
        %p2774 = pneg %p2773
      $region86: #{tpu_custom_call.1} parent=5 // pred_check_branch
        %2776 = sbr.rel (%p2774) target = $region88
      $region87: #{tpu_custom_call.1} parent=5 // pred_region
        %s2777 = ssub.s32 %s26, 2
        // Predicated region
        $region89: #{tpu_custom_call.1} parent=87 // pred_check
          %p2778 = pneg %p291
        $region90: #{tpu_custom_call.1} parent=87 // pred_check_branch
          %2780 = sbr.rel (%p2778) target = $region92
        $region91: #{tpu_custom_call.1} parent=87 // pred_region
          %s2781 = sand.u32 %s276, 1
          %s2782 = scalar_lea.sflag [#allocation4], %s2781
          %s2783 = sand.u32 %s276, 1
          %s2784 = smul.addr %s2783, 16
          %s2785 = scalar_lea.vmem [#allocation13], %s2784
          %2786 = dma.done %s2782, 256
        $region92: #{tpu_custom_call.1} parent=87 // pred_fallthru
          _
      $region88: #{tpu_custom_call.1} parent=5 // pred_fallthru
        _
    $region6: #{tpu_custom_call.1} parent=1 // loop_footer
      %s30 = sadd.s32 1, %s26
    $region7: #{tpu_custom_call.1} parent=1 // loop_footer_branch
      %25 = sbr.rel target = $region3
    $region8: #{tpu_custom_call.1} parent=1 // loop_exit
      _
    %2787 = vsyncpa [#allocation3], 1
    %s2788 = scalar_lea.sflag [#allocation3], 1
    %2789 = vsyncpa %s2788, 1
    %2790 = vsyncpa [#allocation6], 1
    %s2791 = scalar_lea.sflag [#allocation6], 1
    %2792 = vsyncpa %s2791, 1
    %2793 = vsyncpa [#allocation9], 1
    %2794 = vsyncpa [#allocation12], 1
    %2795 = vsyncpa [#allocation4], 1
    %s2796 = scalar_lea.sflag [#allocation4], 1
    %2797 = vsyncpa %s2796, 1

</llo_original>
